<compile_context>
chip_gen: v7x
topology: tpu7x:2x2x1
jax: 0.10.0
libtpu: 0.0.40
codegen_flags: <defaults>
</compile_context>

<pallas_src>
import functools

import jax
import jax.numpy as jnp
from jax.experimental import pallas as pl
from jax.experimental.pallas import tpu as pltpu


# -----------------------------------------------------------------------------
# Pallas kernels
# -----------------------------------------------------------------------------
def _edge_conv_max(edge_ref, w_ref):
    """edge_ref: (K, tm, C) bf16, w_ref: (C, Hout) bf16 -> (tm, Hout) f32.

    Running max over the K neighbors keeps everything in (tm, Hout) vregs
    (no reshape / axis-1 reduction relayout)."""
    K = edge_ref.shape[0]
    acc = jnp.dot(edge_ref[0], w_ref[...], preferred_element_type=jnp.float32)
    for k in range(1, K):  # K is small & static -> unrolled
        acc = jnp.maximum(
            acc, jnp.dot(edge_ref[k], w_ref[...], preferred_element_type=jnp.float32)
        )
    return acc


def _zr_kernel(edge_ref, w_ref, b_ref, h_ref, o_ref):
    """Fused z/r gates.  o = [ sigmoid(convz(hx)) | sigmoid(convr(hx)) * h ]."""
    y = _edge_conv_max(edge_ref, w_ref) + b_ref[...]          # (tm, 2H) f32
    y = jnp.where(y > 0.0, y, 0.1 * y)                        # LeakyReLU(0.1)
    zr = jax.nn.sigmoid(y)                                    # [z | r]
    h = h_ref[...]                                            # (tm, H) f32
    mult = jnp.concatenate([jnp.ones_like(h), h], axis=-1)    # [1 | h]
    o_ref[...] = zr * mult                                    # [z | r*h]


def _q_gate_kernel(edge_ref, w_ref, b_ref, zrh_ref, h_ref, o_ref):
    """q = tanh(convq([r*h ; x])) ; h_new = (1 - z) * h + z * q."""
    H = h_ref.shape[-1]
    y = _edge_conv_max(edge_ref, w_ref) + b_ref[...]          # (tm, H) f32
    y = jnp.where(y > 0.0, y, 0.1 * y)
    q = jnp.tanh(y)
    z = zrh_ref[:, :H]                                        # z part of [z | r*h]
    h = h_ref[...]
    o_ref[...] = (1.0 - z) * h + z * q


# -----------------------------------------------------------------------------
# pallas_call wrappers
# -----------------------------------------------------------------------------
def _zr_call(edge, w, b, h, *, tm):
    B, K, Np, C = edge.shape
    H = h.shape[-1]
    H2 = w.shape[-1]
    grid = (B, Np // tm)
    flops = 2 * B * Np * K * C * H2
    bytes_accessed = (edge.size * 2 + h.size * 4 + B * Np * H2 * 4
                      + w.size * 2 + b.size * 4)
    return pl.pallas_call(
        _zr_kernel,
        out_shape=jax.ShapeDtypeStruct((B, Np, H2), jnp.float32),
        grid=grid,
        in_specs=[
            pl.BlockSpec((None, K, tm, C), lambda bb, i: (bb, 0, i, 0)),
            pl.BlockSpec((C, H2), lambda bb, i: (0, 0)),
            pl.BlockSpec((1, H2), lambda bb, i: (0, 0)),
            pl.BlockSpec((None, tm, H), lambda bb, i: (bb, i, 0)),
        ],
        out_specs=pl.BlockSpec((None, tm, H2), lambda bb, i: (bb, i, 0)),
        compiler_params=pltpu.CompilerParams(
            dimension_semantics=("parallel", "parallel")),
        cost_estimate=pl.CostEstimate(
            flops=flops, transcendentals=B * Np * H2,
            bytes_accessed=bytes_accessed),
    )(edge, w, b, h)


def _q_gate_call(edge, w, b, zrh, h, *, tm):
    B, K, Np, C = edge.shape
    H = h.shape[-1]
    H2 = zrh.shape[-1]
    grid = (B, Np // tm)
    flops = 2 * B * Np * K * C * H
    bytes_accessed = (edge.size * 2 + h.size * 4 + zrh.size * 4
                      + B * Np * H * 4 + w.size * 2 + b.size * 4)
    return pl.pallas_call(
        _q_gate_kernel,
        out_shape=jax.ShapeDtypeStruct((B, Np, H), jnp.float32),
        grid=grid,
        in_specs=[
            pl.BlockSpec((None, K, tm, C), lambda bb, i: (bb, 0, i, 0)),
            pl.BlockSpec((C, H), lambda bb, i: (0, 0)),
            pl.BlockSpec((1, H), lambda bb, i: (0, 0)),
            pl.BlockSpec((None, tm, H2), lambda bb, i: (bb, i, 0)),
            pl.BlockSpec((None, tm, H), lambda bb, i: (bb, i, 0)),
        ],
        out_specs=pl.BlockSpec((None, tm, H), lambda bb, i: (bb, i, 0)),
        compiler_params=pltpu.CompilerParams(
            dimension_semantics=("parallel", "parallel")),
        cost_estimate=pl.CostEstimate(
            flops=flops, transcendentals=B * Np * H,
            bytes_accessed=bytes_accessed),
    )(edge, w, b, zrh, h)


# -----------------------------------------------------------------------------
# Glue (plain JAX): neighbor gather, parameter init, GRU orchestration
# -----------------------------------------------------------------------------
def _pad_n(arr, axis, n_pad):
    n = arr.shape[axis]
    if n == n_pad:
        return arr
    widths = [(0, 0)] * arr.ndim
    widths[axis] = (0, n_pad - n)
    return jnp.pad(arr, widths)


def init_gru_params(key, hidden_dim, input_dim):
    in_ch = hidden_dim + input_dim
    c_in = in_ch + 3  # + relative xyz
    keys = jax.random.split(key, 6)
    scale = 1.0 / jnp.sqrt(jnp.float32(c_in))

    def lin(kw, kb):
        w = scale * jax.random.normal(kw, (c_in, hidden_dim), jnp.float32)
        b = scale * jax.random.normal(kb, (1, hidden_dim), jnp.float32)
        return w, b

    wz, bz = lin(keys[0], keys[1])
    wr, br = lin(keys[2], keys[3])
    wq, bq = lin(keys[4], keys[5])
    return dict(wz=wz, bz=bz, wr=wr, br=br, wq=wq, bq=bq)


@functools.partial(jax.jit, static_argnames=("tm",))
def gru_forward(params, h, x, c, graph, *, tm=256):
    """Pallas GRU forward.  `c` is accepted but unused (matches the PyTorch code)."""
    del c
    nn_idx, nn_rel = graph
    B, N, H = h.shape
    tm = min(tm, N)
    n_blocks = -(-N // tm)
    Np = n_blocks * tm  # pad so the tail is never silently dropped

    # graph in [B, K, N] layout -> per-k contiguous (tm, C) slabs in the kernel
    idx_t = jnp.transpose(nn_idx, (0, 2, 1))            # [B, K, N]
    rel_t = jnp.transpose(nn_rel, (0, 2, 1, 3))         # [B, K, N, 3]
    gather = jax.vmap(lambda f, i: f[i])                # per-batch row gather

    # Fused z|r weights (one wider matmul, lane-denser output); bf16 operands.
    w_zr = jnp.concatenate([params["wz"], params["wr"]], axis=1).astype(jnp.bfloat16)
    b_zr = jnp.concatenate([params["bz"], params["br"]], axis=1)
    w_q = params["wq"].astype(jnp.bfloat16)
    b_q = params["bq"]

    # ---- kernel 1: z = sigmoid(convz(hx)), r*h = sigmoid(convr(hx)) * h ----
    hx = jnp.concatenate([h, x], axis=-1)                               # [B,N,2H]
    edge_hx = jnp.concatenate([gather(hx, idx_t), rel_t], axis=-1)      # [B,K,N,C]
    edge_hx = edge_hx.astype(jnp.bfloat16)

    edge_hx_p = _pad_n(edge_hx, 2, Np)
    h_p = _pad_n(h, 1, Np)

    zrh = _zr_call(edge_hx_p, w_zr, b_zr, h_p, tm=tm)   # [B, Np, 2H] = [z | r*h]
    rh = zrh[:, :N, H:]                                 # [B, N, H]

    # ---- kernel 2: q = tanh(convq([r*h ; x])) ; h = (1-z)*h + z*q ----------
    rhx = jnp.concatenate([rh, x], axis=-1)
    edge_q = jnp.concatenate([gather(rhx, idx_t), rel_t], axis=-1).astype(jnp.bfloat16)
    edge_q_p = _pad_n(edge_q, 2, Np)

    h_new = _q_gate_call(edge_q_p, w_q, b_q, zrh, h_p, tm=tm)           # [B, Np, H]
    return h_new[:, :N]


# -----------------------------------------------------------------------------
# Pure-JAX reference (same math incl. bf16 matmul operands) for correctness
# -----------------------------------------------------------------------------
def _setconv_ref(feats, nn_idx, nn_rel, w, b):
    gathered = jax.vmap(lambda f, i: f[i])(feats, nn_idx)       # [B,N,K,Cf]
    edge = jnp.concatenate([gathered, nn_rel], axis=-1)         # [B,N,K,C]
    y = jnp.einsum("bnkc,cd->bnkd", edge.astype(jnp.bfloat16),
                   w.astype(jnp.bfloat16),
                   preferred_element_type=jnp.float32)
    y = jnp.max(y, axis=2) + b[0]
    return jnp.where(y > 0, y, 0.1 * y)


def gru_ref(params, h, x, c, graph):
    del c
    nn_idx, nn_rel = graph
    hx = jnp.concatenate([h, x], axis=2)
    z = jax.nn.sigmoid(_setconv_ref(hx, nn_idx, nn_rel, params["wz"], params["bz"]))
    r = jax.nn.sigmoid(_setconv_ref(hx, nn_idx, nn_rel, params["wr"], params["br"]))
    rhx = jnp.concatenate([r * h, x], axis=2)
    q = jnp.tanh(_setconv_ref(rhx, nn_idx, nn_rel, params["wq"], params["bq"]))
    return (1.0 - z) * h + z * q


# -----------------------------------------------------------------------------
# Main
# -----------------------------------------------------------------------------
if __name__ == "__main__":
    B, N, K = 2, 64, 8
    hidden_dim, input_dim = 32, 32

    root = jax.random.PRNGKey(0)
    kp, kh, kx, kc, kpts = jax.random.split(root, 5)

    params = init_gru_params(kp, hidden_dim, input_dim)

    h = jax.random.normal(kh, (B, N, hidden_dim), jnp.float32)
    x = jax.random.normal(kx, (B, N, input_dim), jnp.float32)
    c = jax.random.normal(kc, (B, N, hidden_dim), jnp.float32)  # unused by forward

    # Deterministic kNN graph from random point coordinates.
    pts = jax.random.normal(kpts, (B, N, 3), jnp.float32)
    d2 = jnp.sum((pts[:, :, None, :] - pts[:, None, :, :]) ** 2, axis=-1)   # [B,N,N]
    nn_idx = jnp.argsort(d2, axis=-1)[:, :, :K].astype(jnp.int32)           # [B,N,K]
    nn_rel = jax.vmap(lambda p, i: p[i])(pts, nn_idx) - pts[:, :, None, :]  # [B,N,K,3]
    graph = (nn_idx, nn_rel)

    h_out = gru_forward(params, h, x, c, graph)
    h_out = jax.block_until_ready(h_out)

    h_expected = gru_ref(params, h, x, c, graph)
    max_err = float(jnp.max(jnp.abs(h_out - h_expected)))
    assert h_out.shape == (B, N, hidden_dim)
    assert max_err < 5e-3, f"max abs error {max_err}"

    print("KERNEL_OK")
</pallas_src>

<mosaic_0001>
module attributes {stable_mosaic.version = 11 : i64} {
  func.func @_zr_kernel(%arg0: i32, %arg1: i32, %arg2: memref<1x8x64x67xbf16, #tpu.memory_space<vmem>>, %arg3: memref<67x64xbf16, #tpu.memory_space<vmem>>, %arg4: memref<1x64xf32, #tpu.memory_space<vmem>>, %arg5: memref<1x64x32xf32, #tpu.memory_space<vmem>>, %arg6: memref<1x64x64xf32, #tpu.memory_space<vmem>>) attributes {dimension_semantics = [#tpu.dimension_semantics<parallel>, #tpu.dimension_semantics<parallel>], iteration_bounds = array<i64: 2, 1>, scalar_prefetch = 0 : i64, scratch_operands = 0 : i64, tpu.core_type = #tpu.core_type<tc>, window_params = [{transform_indices = @transform_0, window_bounds = array<i64: 1, 8, 64, 67>}, {pipeline_mode = #tpu.pipeline_mode<synchronous>, transform_indices = @transform_1, window_bounds = array<i64: 67, 64>}, {pipeline_mode = #tpu.pipeline_mode<synchronous>, transform_indices = @transform_2, window_bounds = array<i64: 1, 64>}, {transform_indices = @transform_3, window_bounds = array<i64: 1, 64, 32>}, {transform_indices = @transform_4, window_bounds = array<i64: 1, 64, 64>}]} {
    %c0 = arith.constant 0 : index
    %c0_0 = arith.constant 0 : index
    %c0_1 = arith.constant 0 : index
    %c0_2 = arith.constant 0 : index
    %0 = vector.load %arg2[%c0, %c0_0, %c0_1, %c0_2] : memref<1x8x64x67xbf16, #tpu.memory_space<vmem>>, vector<1x1x64x67xbf16>
    %1 = vector.shape_cast %0 : vector<1x1x64x67xbf16> to vector<64x67xbf16>
    %c0_3 = arith.constant 0 : index
    %c0_4 = arith.constant 0 : index
    %2 = vector.load %arg3[%c0_3, %c0_4] : memref<67x64xbf16, #tpu.memory_space<vmem>>, vector<67x64xbf16>
    %cst = arith.constant dense<0.000000e+00> : vector<64x64xf32>
    %3 = tpu.matmul %1, %2, %cst {dimension_numbers = #tpu.dot_dimension_numbers<[1], [0], [0], [1], [0, 0, 1, 1], [], []>} : vector<64x67xbf16>, vector<67x64xbf16>, vector<64x64xf32> -> vector<64x64xf32>
    %c0_5 = arith.constant 0 : index
    %c1 = arith.constant 1 : index
    %c0_6 = arith.constant 0 : index
    %c0_7 = arith.constant 0 : index
    %4 = vector.load %arg2[%c0_5, %c1, %c0_6, %c0_7] : memref<1x8x64x67xbf16, #tpu.memory_space<vmem>>, vector<1x1x64x67xbf16>
    %5 = vector.shape_cast %4 : vector<1x1x64x67xbf16> to vector<64x67xbf16>
    %c0_8 = arith.constant 0 : index
    %c0_9 = arith.constant 0 : index
    %6 = vector.load %arg3[%c0_8, %c0_9] : memref<67x64xbf16, #tpu.memory_space<vmem>>, vector<67x64xbf16>
    %cst_10 = arith.constant dense<0.000000e+00> : vector<64x64xf32>
    %7 = tpu.matmul %5, %6, %cst_10 {dimension_numbers = #tpu.dot_dimension_numbers<[1], [0], [0], [1], [0, 0, 1, 1], [], []>} : vector<64x67xbf16>, vector<67x64xbf16>, vector<64x64xf32> -> vector<64x64xf32>
    %8 = arith.maximumf %3, %7 : vector<64x64xf32>
    %c0_11 = arith.constant 0 : index
    %c2 = arith.constant 2 : index
    %c0_12 = arith.constant 0 : index
    %c0_13 = arith.constant 0 : index
    %9 = vector.load %arg2[%c0_11, %c2, %c0_12, %c0_13] : memref<1x8x64x67xbf16, #tpu.memory_space<vmem>>, vector<1x1x64x67xbf16>
    %10 = vector.shape_cast %9 : vector<1x1x64x67xbf16> to vector<64x67xbf16>
    %c0_14 = arith.constant 0 : index
    %c0_15 = arith.constant 0 : index
    %11 = vector.load %arg3[%c0_14, %c0_15] : memref<67x64xbf16, #tpu.memory_space<vmem>>, vector<67x64xbf16>
    %cst_16 = arith.constant dense<0.000000e+00> : vector<64x64xf32>
    %12 = tpu.matmul %10, %11, %cst_16 {dimension_numbers = #tpu.dot_dimension_numbers<[1], [0], [0], [1], [0, 0, 1, 1], [], []>} : vector<64x67xbf16>, vector<67x64xbf16>, vector<64x64xf32> -> vector<64x64xf32>
    %13 = arith.maximumf %8, %12 : vector<64x64xf32>
    %c0_17 = arith.constant 0 : index
    %c3 = arith.constant 3 : index
    %c0_18 = arith.constant 0 : index
    %c0_19 = arith.constant 0 : index
    %14 = vector.load %arg2[%c0_17, %c3, %c0_18, %c0_19] : memref<1x8x64x67xbf16, #tpu.memory_space<vmem>>, vector<1x1x64x67xbf16>
    %15 = vector.shape_cast %14 : vector<1x1x64x67xbf16> to vector<64x67xbf16>
    %c0_20 = arith.constant 0 : index
    %c0_21 = arith.constant 0 : index
    %16 = vector.load %arg3[%c0_20, %c0_21] : memref<67x64xbf16, #tpu.memory_space<vmem>>, vector<67x64xbf16>
    %cst_22 = arith.constant dense<0.000000e+00> : vector<64x64xf32>
    %17 = tpu.matmul %15, %16, %cst_22 {dimension_numbers = #tpu.dot_dimension_numbers<[1], [0], [0], [1], [0, 0, 1, 1], [], []>} : vector<64x67xbf16>, vector<67x64xbf16>, vector<64x64xf32> -> vector<64x64xf32>
    %18 = arith.maximumf %13, %17 : vector<64x64xf32>
    %c0_23 = arith.constant 0 : index
    %c4 = arith.constant 4 : index
    %c0_24 = arith.constant 0 : index
    %c0_25 = arith.constant 0 : index
    %19 = vector.load %arg2[%c0_23, %c4, %c0_24, %c0_25] : memref<1x8x64x67xbf16, #tpu.memory_space<vmem>>, vector<1x1x64x67xbf16>
    %20 = vector.shape_cast %19 : vector<1x1x64x67xbf16> to vector<64x67xbf16>
    %c0_26 = arith.constant 0 : index
    %c0_27 = arith.constant 0 : index
    %21 = vector.load %arg3[%c0_26, %c0_27] : memref<67x64xbf16, #tpu.memory_space<vmem>>, vector<67x64xbf16>
    %cst_28 = arith.constant dense<0.000000e+00> : vector<64x64xf32>
    %22 = tpu.matmul %20, %21, %cst_28 {dimension_numbers = #tpu.dot_dimension_numbers<[1], [0], [0], [1], [0, 0, 1, 1], [], []>} : vector<64x67xbf16>, vector<67x64xbf16>, vector<64x64xf32> -> vector<64x64xf32>
    %23 = arith.maximumf %18, %22 : vector<64x64xf32>
    %c0_29 = arith.constant 0 : index
    %c5 = arith.constant 5 : index
    %c0_30 = arith.constant 0 : index
    %c0_31 = arith.constant 0 : index
    %24 = vector.load %arg2[%c0_29, %c5, %c0_30, %c0_31] : memref<1x8x64x67xbf16, #tpu.memory_space<vmem>>, vector<1x1x64x67xbf16>
    %25 = vector.shape_cast %24 : vector<1x1x64x67xbf16> to vector<64x67xbf16>
    %c0_32 = arith.constant 0 : index
    %c0_33 = arith.constant 0 : index
    %26 = vector.load %arg3[%c0_32, %c0_33] : memref<67x64xbf16, #tpu.memory_space<vmem>>, vector<67x64xbf16>
    %cst_34 = arith.constant dense<0.000000e+00> : vector<64x64xf32>
    %27 = tpu.matmul %25, %26, %cst_34 {dimension_numbers = #tpu.dot_dimension_numbers<[1], [0], [0], [1], [0, 0, 1, 1], [], []>} : vector<64x67xbf16>, vector<67x64xbf16>, vector<64x64xf32> -> vector<64x64xf32>
    %28 = arith.maximumf %23, %27 : vector<64x64xf32>
    %c0_35 = arith.constant 0 : index
    %c6 = arith.constant 6 : index
    %c0_36 = arith.constant 0 : index
    %c0_37 = arith.constant 0 : index
    %29 = vector.load %arg2[%c0_35, %c6, %c0_36, %c0_37] : memref<1x8x64x67xbf16, #tpu.memory_space<vmem>>, vector<1x1x64x67xbf16>
    %30 = vector.shape_cast %29 : vector<1x1x64x67xbf16> to vector<64x67xbf16>
    %c0_38 = arith.constant 0 : index
    %c0_39 = arith.constant 0 : index
    %31 = vector.load %arg3[%c0_38, %c0_39] : memref<67x64xbf16, #tpu.memory_space<vmem>>, vector<67x64xbf16>
    %cst_40 = arith.constant dense<0.000000e+00> : vector<64x64xf32>
    %32 = tpu.matmul %30, %31, %cst_40 {dimension_numbers = #tpu.dot_dimension_numbers<[1], [0], [0], [1], [0, 0, 1, 1], [], []>} : vector<64x67xbf16>, vector<67x64xbf16>, vector<64x64xf32> -> vector<64x64xf32>
    %33 = arith.maximumf %28, %32 : vector<64x64xf32>
    %c0_41 = arith.constant 0 : index
    %c7 = arith.constant 7 : index
    %c0_42 = arith.constant 0 : index
    %c0_43 = arith.constant 0 : index
    %34 = vector.load %arg2[%c0_41, %c7, %c0_42, %c0_43] : memref<1x8x64x67xbf16, #tpu.memory_space<vmem>>, vector<1x1x64x67xbf16>
    %35 = vector.shape_cast %34 : vector<1x1x64x67xbf16> to vector<64x67xbf16>
    %c0_44 = arith.constant 0 : index
    %c0_45 = arith.constant 0 : index
    %36 = vector.load %arg3[%c0_44, %c0_45] : memref<67x64xbf16, #tpu.memory_space<vmem>>, vector<67x64xbf16>
    %cst_46 = arith.constant dense<0.000000e+00> : vector<64x64xf32>
    %37 = tpu.matmul %35, %36, %cst_46 {dimension_numbers = #tpu.dot_dimension_numbers<[1], [0], [0], [1], [0, 0, 1, 1], [], []>} : vector<64x67xbf16>, vector<67x64xbf16>, vector<64x64xf32> -> vector<64x64xf32>
    %38 = arith.maximumf %33, %37 : vector<64x64xf32>
    %c0_47 = arith.constant 0 : index
    %c0_48 = arith.constant 0 : index
    %39 = vector.load %arg4[%c0_47, %c0_48] : memref<1x64xf32, #tpu.memory_space<vmem>>, vector<1x64xf32>
    %40 = vector.broadcast %39 : vector<1x64xf32> to vector<64x64xf32>
    %41 = arith.addf %38, %40 : vector<64x64xf32>
    %cst_49 = arith.constant 0.000000e+00 : f32
    %42 = vector.broadcast %cst_49 : f32 to vector<64x64xf32>
    %43 = arith.cmpf ogt, %41, %42 : vector<64x64xf32>
    %cst_50 = arith.constant 1.000000e-01 : f32
    %44 = vector.broadcast %cst_50 : f32 to vector<64x64xf32>
    %45 = arith.mulf %44, %41 : vector<64x64xf32>
    %46 = arith.select %43, %41, %45 : vector<64x64xi1>, vector<64x64xf32>
    %47 = arith.negf %46 : vector<64x64xf32>
    %48 = math.exp %47 : vector<64x64xf32>
    %cst_51 = arith.constant 1.000000e+00 : f32
    %49 = vector.broadcast %cst_51 : f32 to vector<64x64xf32>
    %50 = arith.addf %49, %48 : vector<64x64xf32>
    %51 = arith.divf %49, %50 : vector<64x64xf32>
    %c0_52 = arith.constant 0 : index
    %c0_53 = arith.constant 0 : index
    %c0_54 = arith.constant 0 : index
    %52 = vector.load %arg5[%c0_52, %c0_53, %c0_54] : memref<1x64x32xf32, #tpu.memory_space<vmem>>, vector<1x64x32xf32>
    %53 = vector.shape_cast %52 : vector<1x64x32xf32> to vector<64x32xf32>
    %cst_55 = arith.constant 1.000000e+00 : f32
    %54 = vector.broadcast %cst_55 : f32 to vector<64x32xf32>
    %55 = tpu.concatenate %54, %53 in 1 : vector<64x32xf32>, vector<64x32xf32> -> vector<64x64xf32>
    %56 = arith.mulf %51, %55 : vector<64x64xf32>
    %c0_56 = arith.constant 0 : index
    %c0_57 = arith.constant 0 : index
    %c0_58 = arith.constant 0 : index
    %57 = vector.load %arg6[%c0_56, %c0_57, %c0_58] : memref<1x64x64xf32, #tpu.memory_space<vmem>>, vector<1x64x64xf32>
    %58 = vector.shape_cast %57 : vector<1x64x64xf32> to vector<64x64xf32>
    %59 = vector.shape_cast %56 : vector<64x64xf32> to vector<1x64x64xf32>
    tpu.vector_store %arg6[%c0_56, %c0_57, %c0_58], %59 {strides = array<i32>} : memref<1x64x64xf32, #tpu.memory_space<vmem>>, vector<1x64x64xf32>,
    return
  }
  func.func @transform_0(%arg0: i32, %arg1: i32) -> (i32, i32, i32, i32) {
    %c0_i32 = arith.constant 0 : i32
    %c0_i32_0 = arith.constant 0 : i32
    %c0_i32_1 = arith.constant 0 : i32
    return %arg0, %c0_i32, %arg1, %c0_i32_0 : i32, i32, i32, i32
  }
  func.func @transform_1(%arg0: i32, %arg1: i32) -> (i32, i32) {
    %c0_i32 = arith.constant 0 : i32
    %c0_i32_0 = arith.constant 0 : i32
    %c0_i32_1 = arith.constant 0 : i32
    return %c0_i32, %c0_i32_0 : i32, i32
  }
  func.func @transform_2(%arg0: i32, %arg1: i32) -> (i32, i32) {
    %c0_i32 = arith.constant 0 : i32
    %c0_i32_0 = arith.constant 0 : i32
    %c0_i32_1 = arith.constant 0 : i32
    return %c0_i32, %c0_i32_0 : i32, i32
  }
  func.func @transform_3(%arg0: i32, %arg1: i32) -> (i32, i32, i32) {
    %c0_i32 = arith.constant 0 : i32
    %c0_i32_0 = arith.constant 0 : i32
    return %arg0, %arg1, %c0_i32 : i32, i32, i32
  }
  func.func @transform_4(%arg0: i32, %arg1: i32) -> (i32, i32, i32) {
    %c0_i32 = arith.constant 0 : i32
    %c0_i32_0 = arith.constant 0 : i32
    return %arg0, %arg1, %c0_i32 : i32, i32, i32
  }
}

module attributes {stable_mosaic.version = 11 : i64} {
  func.func @_q_gate_kernel(%arg0: i32, %arg1: i32, %arg2: memref<1x8x64x67xbf16, #tpu.memory_space<vmem>>, %arg3: memref<67x32xbf16, #tpu.memory_space<vmem>>, %arg4: memref<1x32xf32, #tpu.memory_space<vmem>>, %arg5: memref<1x64x64xf32, #tpu.memory_space<vmem>>, %arg6: memref<1x64x32xf32, #tpu.memory_space<vmem>>, %arg7: memref<1x64x32xf32, #tpu.memory_space<vmem>>) attributes {dimension_semantics = [#tpu.dimension_semantics<parallel>, #tpu.dimension_semantics<parallel>], iteration_bounds = array<i64: 2, 1>, scalar_prefetch = 0 : i64, scratch_operands = 0 : i64, tpu.core_type = #tpu.core_type<tc>, window_params = [{transform_indices = @transform_0, window_bounds = array<i64: 1, 8, 64, 67>}, {pipeline_mode = #tpu.pipeline_mode<synchronous>, transform_indices = @transform_1, window_bounds = array<i64: 67, 32>}, {pipeline_mode = #tpu.pipeline_mode<synchronous>, transform_indices = @transform_2, window_bounds = array<i64: 1, 32>}, {transform_indices = @transform_3, window_bounds = array<i64: 1, 64, 64>}, {transform_indices = @transform_4, window_bounds = array<i64: 1, 64, 32>}, {transform_indices = @transform_5, window_bounds = array<i64: 1, 64, 32>}]} {
    %c0 = arith.constant 0 : index
    %c0_0 = arith.constant 0 : index
    %c0_1 = arith.constant 0 : index
    %c0_2 = arith.constant 0 : index
    %0 = vector.load %arg2[%c0, %c0_0, %c0_1, %c0_2] : memref<1x8x64x67xbf16, #tpu.memory_space<vmem>>, vector<1x1x64x67xbf16>
    %1 = vector.shape_cast %0 : vector<1x1x64x67xbf16> to vector<64x67xbf16>
    %c0_3 = arith.constant 0 : index
    %c0_4 = arith.constant 0 : index
    %2 = vector.load %arg3[%c0_3, %c0_4] : memref<67x32xbf16, #tpu.memory_space<vmem>>, vector<67x32xbf16>
    %cst = arith.constant dense<0.000000e+00> : vector<64x32xf32>
    %3 = tpu.matmul %1, %2, %cst {dimension_numbers = #tpu.dot_dimension_numbers<[1], [0], [0], [1], [0, 0, 1, 1], [], []>} : vector<64x67xbf16>, vector<67x32xbf16>, vector<64x32xf32> -> vector<64x32xf32>
    %c0_5 = arith.constant 0 : index
    %c1 = arith.constant 1 : index
    %c0_6 = arith.constant 0 : index
    %c0_7 = arith.constant 0 : index
    %4 = vector.load %arg2[%c0_5, %c1, %c0_6, %c0_7] : memref<1x8x64x67xbf16, #tpu.memory_space<vmem>>, vector<1x1x64x67xbf16>
    %5 = vector.shape_cast %4 : vector<1x1x64x67xbf16> to vector<64x67xbf16>
    %c0_8 = arith.constant 0 : index
    %c0_9 = arith.constant 0 : index
    %6 = vector.load %arg3[%c0_8, %c0_9] : memref<67x32xbf16, #tpu.memory_space<vmem>>, vector<67x32xbf16>
    %cst_10 = arith.constant dense<0.000000e+00> : vector<64x32xf32>
    %7 = tpu.matmul %5, %6, %cst_10 {dimension_numbers = #tpu.dot_dimension_numbers<[1], [0], [0], [1], [0, 0, 1, 1], [], []>} : vector<64x67xbf16>, vector<67x32xbf16>, vector<64x32xf32> -> vector<64x32xf32>
    %8 = arith.maximumf %3, %7 : vector<64x32xf32>
    %c0_11 = arith.constant 0 : index
    %c2 = arith.constant 2 : index
    %c0_12 = arith.constant 0 : index
    %c0_13 = arith.constant 0 : index
    %9 = vector.load %arg2[%c0_11, %c2, %c0_12, %c0_13] : memref<1x8x64x67xbf16, #tpu.memory_space<vmem>>, vector<1x1x64x67xbf16>
    %10 = vector.shape_cast %9 : vector<1x1x64x67xbf16> to vector<64x67xbf16>
    %c0_14 = arith.constant 0 : index
    %c0_15 = arith.constant 0 : index
    %11 = vector.load %arg3[%c0_14, %c0_15] : memref<67x32xbf16, #tpu.memory_space<vmem>>, vector<67x32xbf16>
    %cst_16 = arith.constant dense<0.000000e+00> : vector<64x32xf32>
    %12 = tpu.matmul %10, %11, %cst_16 {dimension_numbers = #tpu.dot_dimension_numbers<[1], [0], [0], [1], [0, 0, 1, 1], [], []>} : vector<64x67xbf16>, vector<67x32xbf16>, vector<64x32xf32> -> vector<64x32xf32>
    %13 = arith.maximumf %8, %12 : vector<64x32xf32>
    %c0_17 = arith.constant 0 : index
    %c3 = arith.constant 3 : index
    %c0_18 = arith.constant 0 : index
    %c0_19 = arith.constant 0 : index
    %14 = vector.load %arg2[%c0_17, %c3, %c0_18, %c0_19] : memref<1x8x64x67xbf16, #tpu.memory_space<vmem>>, vector<1x1x64x67xbf16>
    %15 = vector.shape_cast %14 : vector<1x1x64x67xbf16> to vector<64x67xbf16>
    %c0_20 = arith.constant 0 : index
    %c0_21 = arith.constant 0 : index
    %16 = vector.load %arg3[%c0_20, %c0_21] : memref<67x32xbf16, #tpu.memory_space<vmem>>, vector<67x32xbf16>
    %cst_22 = arith.constant dense<0.000000e+00> : vector<64x32xf32>
    %17 = tpu.matmul %15, %16, %cst_22 {dimension_numbers = #tpu.dot_dimension_numbers<[1], [0], [0], [1], [0, 0, 1, 1], [], []>} : vector<64x67xbf16>, vector<67x32xbf16>, vector<64x32xf32> -> vector<64x32xf32>
    %18 = arith.maximumf %13, %17 : vector<64x32xf32>
    %c0_23 = arith.constant 0 : index
    %c4 = arith.constant 4 : index
    %c0_24 = arith.constant 0 : index
    %c0_25 = arith.constant 0 : index
    %19 = vector.load %arg2[%c0_23, %c4, %c0_24, %c0_25] : memref<1x8x64x67xbf16, #tpu.memory_space<vmem>>, vector<1x1x64x67xbf16>
    %20 = vector.shape_cast %19 : vector<1x1x64x67xbf16> to vector<64x67xbf16>
    %c0_26 = arith.constant 0 : index
    %c0_27 = arith.constant 0 : index
    %21 = vector.load %arg3[%c0_26, %c0_27] : memref<67x32xbf16, #tpu.memory_space<vmem>>, vector<67x32xbf16>
    %cst_28 = arith.constant dense<0.000000e+00> : vector<64x32xf32>
    %22 = tpu.matmul %20, %21, %cst_28 {dimension_numbers = #tpu.dot_dimension_numbers<[1], [0], [0], [1], [0, 0, 1, 1], [], []>} : vector<64x67xbf16>, vector<67x32xbf16>, vector<64x32xf32> -> vector<64x32xf32>
    %23 = arith.maximumf %18, %22 : vector<64x32xf32>
    %c0_29 = arith.constant 0 : index
    %c5 = arith.constant 5 : index
    %c0_30 = arith.constant 0 : index
    %c0_31 = arith.constant 0 : index
    %24 = vector.load %arg2[%c0_29, %c5, %c0_30, %c0_31] : memref<1x8x64x67xbf16, #tpu.memory_space<vmem>>, vector<1x1x64x67xbf16>
    %25 = vector.shape_cast %24 : vector<1x1x64x67xbf16> to vector<64x67xbf16>
    %c0_32 = arith.constant 0 : index
    %c0_33 = arith.constant 0 : index
    %26 = vector.load %arg3[%c0_32, %c0_33] : memref<67x32xbf16, #tpu.memory_space<vmem>>, vector<67x32xbf16>
    %cst_34 = arith.constant dense<0.000000e+00> : vector<64x32xf32>
    %27 = tpu.matmul %25, %26, %cst_34 {dimension_numbers = #tpu.dot_dimension_numbers<[1], [0], [0], [1], [0, 0, 1, 1], [], []>} : vector<64x67xbf16>, vector<67x32xbf16>, vector<64x32xf32> -> vector<64x32xf32>
    %28 = arith.maximumf %23, %27 : vector<64x32xf32>
    %c0_35 = arith.constant 0 : index
    %c6 = arith.constant 6 : index
    %c0_36 = arith.constant 0 : index
    %c0_37 = arith.constant 0 : index
    %29 = vector.load %arg2[%c0_35, %c6, %c0_36, %c0_37] : memref<1x8x64x67xbf16, #tpu.memory_space<vmem>>, vector<1x1x64x67xbf16>
    %30 = vector.shape_cast %29 : vector<1x1x64x67xbf16> to vector<64x67xbf16>
    %c0_38 = arith.constant 0 : index
    %c0_39 = arith.constant 0 : index
    %31 = vector.load %arg3[%c0_38, %c0_39] : memref<67x32xbf16, #tpu.memory_space<vmem>>, vector<67x32xbf16>
    %cst_40 = arith.constant dense<0.000000e+00> : vector<64x32xf32>
    %32 = tpu.matmul %30, %31, %cst_40 {dimension_numbers = #tpu.dot_dimension_numbers<[1], [0], [0], [1], [0, 0, 1, 1], [], []>} : vector<64x67xbf16>, vector<67x32xbf16>, vector<64x32xf32> -> vector<64x32xf32>
    %33 = arith.maximumf %28, %32 : vector<64x32xf32>
    %c0_41 = arith.constant 0 : index
    %c7 = arith.constant 7 : index
    %c0_42 = arith.constant 0 : index
    %c0_43 = arith.constant 0 : index
    %34 = vector.load %arg2[%c0_41, %c7, %c0_42, %c0_43] : memref<1x8x64x67xbf16, #tpu.memory_space<vmem>>, vector<1x1x64x67xbf16>
    %35 = vector.shape_cast %34 : vector<1x1x64x67xbf16> to vector<64x67xbf16>
    %c0_44 = arith.constant 0 : index
    %c0_45 = arith.constant 0 : index
    %36 = vector.load %arg3[%c0_44, %c0_45] : memref<67x32xbf16, #tpu.memory_space<vmem>>, vector<67x32xbf16>
    %cst_46 = arith.constant dense<0.000000e+00> : vector<64x32xf32>
    %37 = tpu.matmul %35, %36, %cst_46 {dimension_numbers = #tpu.dot_dimension_numbers<[1], [0], [0], [1], [0, 0, 1, 1], [], []>} : vector<64x67xbf16>, vector<67x32xbf16>, vector<64x32xf32> -> vector<64x32xf32>
    %38 = arith.maximumf %33, %37 : vector<64x32xf32>
    %c0_47 = arith.constant 0 : index
    %c0_48 = arith.constant 0 : index
    %39 = vector.load %arg4[%c0_47, %c0_48] : memref<1x32xf32, #tpu.memory_space<vmem>>, vector<1x32xf32>
    %40 = vector.broadcast %39 : vector<1x32xf32> to vector<64x32xf32>
    %41 = arith.addf %38, %40 : vector<64x32xf32>
    %cst_49 = arith.constant 0.000000e+00 : f32
    %42 = vector.broadcast %cst_49 : f32 to vector<64x32xf32>
    %43 = arith.cmpf ogt, %41, %42 : vector<64x32xf32>
    %cst_50 = arith.constant 1.000000e-01 : f32
    %44 = vector.broadcast %cst_50 : f32 to vector<64x32xf32>
    %45 = arith.mulf %44, %41 : vector<64x32xf32>
    %46 = arith.select %43, %41, %45 : vector<64x32xi1>, vector<64x32xf32>
    %47 = math.tanh %46 : vector<64x32xf32>
    %c0_51 = arith.constant 0 : index
    %c0_52 = arith.constant 0 : index
    %c0_53 = arith.constant 0 : index
    %48 = vector.load %arg5[%c0_51, %c0_52, %c0_53] : memref<1x64x64xf32, #tpu.memory_space<vmem>>, vector<1x64x32xf32>
    %49 = vector.shape_cast %48 : vector<1x64x32xf32> to vector<64x32xf32>
    %c0_54 = arith.constant 0 : index
    %c0_55 = arith.constant 0 : index
    %c0_56 = arith.constant 0 : index
    %50 = vector.load %arg6[%c0_54, %c0_55, %c0_56] : memref<1x64x32xf32, #tpu.memory_space<vmem>>, vector<1x64x32xf32>
    %51 = vector.shape_cast %50 : vector<1x64x32xf32> to vector<64x32xf32>
    %cst_57 = arith.constant 1.000000e+00 : f32
    %52 = vector.broadcast %cst_57 : f32 to vector<64x32xf32>
    %53 = arith.subf %52, %49 : vector<64x32xf32>
    %54 = arith.mulf %53, %51 : vector<64x32xf32>
    %55 = arith.mulf %49, %47 : vector<64x32xf32>
    %56 = arith.addf %54, %55 : vector<64x32xf32>
    %c0_58 = arith.constant 0 : index
    %c0_59 = arith.constant 0 : index
    %c0_60 = arith.constant 0 : index
    %57 = vector.load %arg7[%c0_58, %c0_59, %c0_60] : memref<1x64x32xf32, #tpu.memory_space<vmem>>, vector<1x64x32xf32>
    %58 = vector.shape_cast %57 : vector<1x64x32xf32> to vector<64x32xf32>
    %59 = vector.shape_cast %56 : vector<64x32xf32> to vector<1x64x32xf32>
    tpu.vector_store %arg7[%c0_58, %c0_59, %c0_60], %59 {strides = array<i32>} : memref<1x64x32xf32, #tpu.memory_space<vmem>>, vector<1x64x32xf32>,
    return
  }
  func.func @transform_0(%arg0: i32, %arg1: i32) -> (i32, i32, i32, i32) {
    %c0_i32 = arith.constant 0 : i32
    %c0_i32_0 = arith.constant 0 : i32
    %c0_i32_1 = arith.constant 0 : i32
    return %arg0, %c0_i32, %arg1, %c0_i32_0 : i32, i32, i32, i32
  }
  func.func @transform_1(%arg0: i32, %arg1: i32) -> (i32, i32) {
    %c0_i32 = arith.constant 0 : i32
    %c0_i32_0 = arith.constant 0 : i32
    %c0_i32_1 = arith.constant 0 : i32
    return %c0_i32, %c0_i32_0 : i32, i32
  }
  func.func @transform_2(%arg0: i32, %arg1: i32) -> (i32, i32) {
    %c0_i32 = arith.constant 0 : i32
    %c0_i32_0 = arith.constant 0 : i32
    %c0_i32_1 = arith.constant 0 : i32
    return %c0_i32, %c0_i32_0 : i32, i32
  }
  func.func @transform_3(%arg0: i32, %arg1: i32) -> (i32, i32, i32) {
    %c0_i32 = arith.constant 0 : i32
    %c0_i32_0 = arith.constant 0 : i32
    return %arg0, %arg1, %c0_i32 : i32, i32, i32
  }
  func.func @transform_4(%arg0: i32, %arg1: i32) -> (i32, i32, i32) {
    %c0_i32 = arith.constant 0 : i32
    %c0_i32_0 = arith.constant 0 : i32
    return %arg0, %arg1, %c0_i32 : i32, i32, i32
  }
  func.func @transform_5(%arg0: i32, %arg1: i32) -> (i32, i32, i32) {
    %c0_i32 = arith.constant 0 : i32
    %c0_i32_0 = arith.constant 0 : i32
    return %arg0, %arg1, %c0_i32 : i32, i32, i32
  }
}

</mosaic_0001>

<llo_original>
// kernel: gru_forward.3
$region0: #{gru_forward.3}
  #allocation0 [shape = 'u32[]', space=smem, size = 0x4, offset = 0x4, fixed_abs, tag = 'smem constant byte address 0x4 - core index']
  #allocation1 [shape = 'u32[144,128]{1,0:T(1,128)}', space=vmem, size = 0x12000, scoped, tag = 'internal scratch']
  %s0 = inlined_call_operand.vmem [shape: bf16[2,8,64,67], index: 0, kind: input, shape index: {}]
  %s1 = inlined_call_operand.vmem [shape: bf16[67,32], index: 1, kind: input, shape index: {}]
  %s2 = inlined_call_operand.vmem [shape: f32[1,32], index: 2, kind: input, shape index: {}]
  %s3 = inlined_call_operand.vmem [shape: f32[2,64,64], index: 3, kind: input, shape index: {}]
  %s4 = inlined_call_operand.vmem [shape: f32[2,64,32], index: 4, kind: input, shape index: {}]
  %s5 = inlined_call_operand.vmem [shape: f32[2,64,32], index: 5, kind: output, shape index: {}]
  %s6 = sld [smem:[#allocation0]]
  $region53: #{gru_forward.3} parent=0
    _
  %s8 = ssub.s32 1, %s6
  %s9 = scalar_select 0, %s8, %s6
  loop: start=0, step=1, limit=4
  $region2: #{gru_forward.3} parent=0 // loop_pre_header
    _
  $region3: #{gru_forward.3} parent=0 // loop_header
    %s11 = sphi 0, %s15
    %p12 = scmp.ge.s32.totalorder %s11, 4
    %s18 = sphi 0, %s30
    %s19 = sphi 0, %s26
    %s20 = sphi 0, %s18
    %s21 = sphi 0, %s19
    %s22 = sphi 0, %s20
    %s23 = sphi 0, %s21
    %s35 = sphi 0, %s37
    %s38 = sphi 0, %s35
    %s39 = sphi 0, %s38
    %s55 = sphi 0, %s39
    %s59 = sphi 0, %s59
    %s61 = sphi 0, %s59
    %s62 = sphi 0, %s61
    %s76 = sphi 0, %s62
    %s80 = sphi 0, %s80
    %s82 = sphi 0, %s80
    %s83 = sphi 0, %s82
    %s97 = sphi 0, %s83
    %s105 = sphi 0, %s107
    %s108 = sphi 0, %s105
    %s109 = sphi 0, %s108
    %s125 = sphi 0, %s109
    %s133 = sphi 0, %s135
    %s136 = sphi 0, %s133
    %s137 = sphi 0, %s136
    %s153 = sphi 0, %s137
    %s161 = sphi 0, %s163
    %s164 = sphi 0, %s161
    %s165 = sphi 0, %s164
    %s181 = sphi 0, %s165
  $region4: #{gru_forward.3} parent=0 // loop_header_branch
    %14 = sbr.rel (%p12) target = $region8
  $region5: #{gru_forward.3} parent=0 // loop_body
    %s16 = ssub.s32 %s11, 1
    %s17 = ssub.s32 %s11, 2
    %s24 = sadd.s32 1, %s19
    %p25 = scmp.ge.s32.totalorder %s24, 1
    %s26 = scalar_select %p25, 0, %s24
    %s27 = sadd.s32 1, %s18
    %s28 = scalar_select %p25, %s27, %s18
    %p29 = scmp.ge.s32.totalorder %s28, 2
    %s30 = scalar_select %p29, 0, %s28
    %s31 = ssub.s32 %s18, %s30
    %s32 = ssub.s32 %s19, %s26
    %s33 = sor.u32 %s31, %s32
    %p34 = scmp.eq.s32.totalorder %s33, 0
    %s36 = sadd.s32 %s35, 1
    %s37 = scalar_select %p34, %s35, %s36
    %p40 = pneg %p34
    %p41 = scmp.eq.s32.totalorder %s11, 1
    %p42 = por %p40, %p41
    %p43 = scmp.ne.s32.totalorder %s35, %s38
    %p44 = scmp.eq.s32.totalorder %s11, 0
    %p45 = por %p43, %p44
    %p46 = scmp.ne.s32.totalorder %s35, %s38
    %p47 = scmp.eq.s32.totalorder %s16, 1
    %p48 = por %p46, %p47
    %p49 = scmp.ne.s32.totalorder %s38, %s39
    %p50 = scmp.eq.s32.totalorder %s16, 0
    %p51 = por %p49, %p50
    %p52 = scmp.ne.s32.totalorder %s38, %s39
    %p53 = scmp.eq.s32.totalorder %s17, 1
    %p54 = por %p52, %p53
    %p56 = scmp.ne.s32.totalorder %s39, %s55
    %p57 = scmp.eq.s32.totalorder %s17, 0
    %p58 = por %p56, %p57
    %s60 = sadd.s32 %s59, 1
    %p63 = scmp.eq.s32.totalorder %s11, 1
    %p64 = scmp.ne.s32.totalorder %s59, %s61
    %p65 = scmp.eq.s32.totalorder %s11, 0
    %p66 = por %p64, %p65
    %p67 = scmp.ne.s32.totalorder %s59, %s61
    %p68 = scmp.eq.s32.totalorder %s16, 1
    %p69 = por %p67, %p68
    %p70 = scmp.ne.s32.totalorder %s61, %s62
    %p71 = scmp.eq.s32.totalorder %s16, 0
    %p72 = por %p70, %p71
    %p73 = scmp.ne.s32.totalorder %s61, %s62
    %p74 = scmp.eq.s32.totalorder %s17, 1
    %p75 = por %p73, %p74
    %p77 = scmp.ne.s32.totalorder %s62, %s76
    %p78 = scmp.eq.s32.totalorder %s17, 0
    %p79 = por %p77, %p78
    %s81 = sadd.s32 %s80, 1
    %p84 = scmp.eq.s32.totalorder %s11, 1
    %p85 = scmp.ne.s32.totalorder %s80, %s82
    %p86 = scmp.eq.s32.totalorder %s11, 0
    %p87 = por %p85, %p86
    %p88 = scmp.ne.s32.totalorder %s80, %s82
    %p89 = scmp.eq.s32.totalorder %s16, 1
    %p90 = por %p88, %p89
    %p91 = scmp.ne.s32.totalorder %s82, %s83
    %p92 = scmp.eq.s32.totalorder %s16, 0
    %p93 = por %p91, %p92
    %p94 = scmp.ne.s32.totalorder %s82, %s83
    %p95 = scmp.eq.s32.totalorder %s17, 1
    %p96 = por %p94, %p95
    %p98 = scmp.ne.s32.totalorder %s83, %s97
    %p99 = scmp.eq.s32.totalorder %s17, 0
    %p100 = por %p98, %p99
    %s101 = ssub.s32 %s18, %s30
    %s102 = ssub.s32 %s19, %s26
    %s103 = sor.u32 %s101, %s102
    %p104 = scmp.eq.s32.totalorder %s103, 0
    %s106 = sadd.s32 %s105, 1
    %s107 = scalar_select %p104, %s105, %s106
    %p110 = pneg %p104
    %p111 = scmp.eq.s32.totalorder %s11, 1
    %p112 = por %p110, %p111
    %p113 = scmp.ne.s32.totalorder %s105, %s108
    %p114 = scmp.eq.s32.totalorder %s11, 0
    %p115 = por %p113, %p114
    %p116 = scmp.ne.s32.totalorder %s105, %s108
    %p117 = scmp.eq.s32.totalorder %s16, 1
    %p118 = por %p116, %p117
    %p119 = scmp.ne.s32.totalorder %s108, %s109
    %p120 = scmp.eq.s32.totalorder %s16, 0
    %p121 = por %p119, %p120
    %p122 = scmp.ne.s32.totalorder %s108, %s109
    %p123 = scmp.eq.s32.totalorder %s17, 1
    %p124 = por %p122, %p123
    %p126 = scmp.ne.s32.totalorder %s109, %s125
    %p127 = scmp.eq.s32.totalorder %s17, 0
    %p128 = por %p126, %p127
    %s129 = ssub.s32 %s18, %s30
    %s130 = ssub.s32 %s19, %s26
    %s131 = sor.u32 %s129, %s130
    %p132 = scmp.eq.s32.totalorder %s131, 0
    %s134 = sadd.s32 %s133, 1
    %s135 = scalar_select %p132, %s133, %s134
    %p138 = pneg %p132
    %p139 = scmp.eq.s32.totalorder %s11, 1
    %p140 = por %p138, %p139
    %p141 = scmp.ne.s32.totalorder %s133, %s136
    %p142 = scmp.eq.s32.totalorder %s11, 0
    %p143 = por %p141, %p142
    %p144 = scmp.ne.s32.totalorder %s133, %s136
    %p145 = scmp.eq.s32.totalorder %s16, 1
    %p146 = por %p144, %p145
    %p147 = scmp.ne.s32.totalorder %s136, %s137
    %p148 = scmp.eq.s32.totalorder %s16, 0
    %p149 = por %p147, %p148
    %p150 = scmp.ne.s32.totalorder %s136, %s137
    %p151 = scmp.eq.s32.totalorder %s17, 1
    %p152 = por %p150, %p151
    %p154 = scmp.ne.s32.totalorder %s137, %s153
    %p155 = scmp.eq.s32.totalorder %s17, 0
    %p156 = por %p154, %p155
    %s157 = ssub.s32 %s18, %s30
    %s158 = ssub.s32 %s19, %s26
    %s159 = sor.u32 %s157, %s158
    %p160 = scmp.eq.s32.totalorder %s159, 0
    %s162 = sadd.s32 %s161, 1
    %s163 = scalar_select %p160, %s161, %s162
    %p166 = pneg %p160
    %p167 = scmp.eq.s32.totalorder %s11, 1
    %p168 = por %p166, %p167
    %p169 = scmp.ne.s32.totalorder %s161, %s164
    %p170 = scmp.eq.s32.totalorder %s11, 0
    %p171 = por %p169, %p170
    %p172 = scmp.ne.s32.totalorder %s161, %s164
    %p173 = scmp.eq.s32.totalorder %s16, 1
    %p174 = por %p172, %p173
    %p175 = scmp.ne.s32.totalorder %s164, %s165
    %p176 = scmp.eq.s32.totalorder %s16, 0
    %p177 = por %p175, %p176
    %p178 = scmp.ne.s32.totalorder %s164, %s165
    %p179 = scmp.eq.s32.totalorder %s17, 1
    %p180 = por %p178, %p179
    %p182 = scmp.ne.s32.totalorder %s165, %s181
    %p183 = scmp.eq.s32.totalorder %s17, 0
    %p184 = por %p182, %p183
    %p185 = scmp.le.s32.totalorder 1, %s11
    %p186 = scmp.lt.s32.totalorder %s11, 3
    %p187 = pnand %p185, %p186
    %p188 = pneg %p187
    // Predicated region
    $region9: #{gru_forward.3} parent=5 // pred_check
      _
    $region10: #{gru_forward.3} parent=5 // pred_check_branch
      %190 = sbr.rel (%p187) target = $region12
    $region11: #{gru_forward.3} parent=5 // pred_region
      %s191 = ssub.s32 %s11, 1
      // Predicated region
      $region13: #{gru_forward.3} parent=11 // pred_check
        %p192 = pneg %p72
      $region14: #{gru_forward.3} parent=11 // pred_check_branch
        %194 = sbr.rel (%p192) target = $region16
      $region15: #{gru_forward.3} parent=11 // pred_region
        _
      $region16: #{gru_forward.3} parent=11 // pred_fallthru
        _
      // Predicated region
      $region17: #{gru_forward.3} parent=11 // pred_check
        %p195 = pneg %p93
      $region18: #{gru_forward.3} parent=11 // pred_check_branch
        %197 = sbr.rel (%p195) target = $region20
      $region19: #{gru_forward.3} parent=11 // pred_region
        _
      $region20: #{gru_forward.3} parent=11 // pred_fallthru
        _
    $region12: #{gru_forward.3} parent=5 // pred_fallthru
      _
    %p198 = scmp.lt.s32.totalorder %s11, 2
    // Predicated region
    $region21: #{gru_forward.3} parent=5 // pred_check
      %p199 = pneg %p198
    $region22: #{gru_forward.3} parent=5 // pred_check_branch
      %201 = sbr.rel (%p199) target = $region24
    $region23: #{gru_forward.3} parent=5 // pred_region
      // Predicated region
      $region25: #{gru_forward.3} parent=23 // pred_check
        %p202 = pneg %p45
      $region26: #{gru_forward.3} parent=23 // pred_check_branch
        %204 = sbr.rel (%p202) target = $region28
      $region27: #{gru_forward.3} parent=23 // pred_region
        %s205 = smul.u32 8, %s19
        %p206 = scmp.lt.s32.totalorder %s18, 1
        %s207 = scalar_select %p206, %s18, 1
        %p208 = scmp.lt.s32.totalorder %s205, 7
        %s209 = scalar_select %p208, %s205, 7
        %s210 = smul.addr %s207, 64
        %s211 = sadd.s32 %s209, %s210
        %s212 = smul.addr %s211, 4
        %s213 = scalar_lea.vmem %s0, %s212
        %s214 = smul.u32 8, %s19
      $region28: #{gru_forward.3} parent=23 // pred_fallthru
        _
      // Predicated region
      $region29: #{gru_forward.3} parent=23 // pred_check
        %p215 = pneg %p115
      $region30: #{gru_forward.3} parent=23 // pred_check_branch
        %217 = sbr.rel (%p215) target = $region32
      $region31: #{gru_forward.3} parent=23 // pred_region
        %s218 = smul.u32 8, %s19
        %p219 = scmp.lt.s32.totalorder %s18, 1
        %s220 = scalar_select %p219, %s18, 1
        %p221 = scmp.lt.s32.totalorder %s218, 7
        %s222 = scalar_select %p221, %s218, 7
        %s223 = smul.addr %s220, 8
        %s224 = sadd.s32 %s222, %s223
        %s225 = smul.addr %s224, 8
        %s226 = scalar_lea.vmem %s3, %s225
        %s227 = smul.u32 8, %s19
      $region32: #{gru_forward.3} parent=23 // pred_fallthru
        _
      // Predicated region
      $region33: #{gru_forward.3} parent=23 // pred_check
        %p228 = pneg %p143
      $region34: #{gru_forward.3} parent=23 // pred_check_branch
        %230 = sbr.rel (%p228) target = $region36
      $region35: #{gru_forward.3} parent=23 // pred_region
        %s231 = smul.u32 8, %s19
        %p232 = scmp.lt.s32.totalorder %s18, 1
        %s233 = scalar_select %p232, %s18, 1
        %p234 = scmp.lt.s32.totalorder %s231, 7
        %s235 = scalar_select %p234, %s231, 7
        %s236 = smul.addr %s233, 8
        %s237 = sadd.s32 %s235, %s236
        %s238 = smul.addr %s237, 8
        %s239 = scalar_lea.vmem %s4, %s238
        %s240 = smul.u32 8, %s19
      $region36: #{gru_forward.3} parent=23 // pred_fallthru
        _
    $region24: #{gru_forward.3} parent=5 // pred_fallthru
      _
    %p241 = scmp.le.s32.totalorder 1, %s11
    %p242 = scmp.lt.s32.totalorder %s11, 3
    %p243 = pnand %p241, %p242
    %p244 = pneg %p243
    // Predicated region
    $region37: #{gru_forward.3} parent=5 // pred_check
      _
    $region38: #{gru_forward.3} parent=5 // pred_check_branch
      %246 = sbr.rel (%p243) target = $region40
    $region39: #{gru_forward.3} parent=5 // pred_region
      %s247 = ssub.s32 %s11, 1
      %s248 = smul.u32 8, %s21
      %p249 = scmp.lt.s32.totalorder %s20, 1
      %s250 = scalar_select %p249, %s20, 1
      %p251 = scmp.lt.s32.totalorder %s248, 7
      %s252 = scalar_select %p251, %s248, 7
      %s253 = smul.addr %s250, 64
      %s254 = sadd.s32 %s252, %s253
      %s255 = smul.addr %s254, 4
      %s256 = scalar_lea.vmem %s0, %s255
      %p257 = pneg %p51
      %p258 = pneg %p48
      %p259 = pneg %p72
      %p260 = pneg %p69
      %p261 = pneg %p93
      %p262 = pneg %p90
      %s263 = smul.u32 8, %s21
      %p264 = scmp.lt.s32.totalorder %s20, 1
      %s265 = scalar_select %p264, %s20, 1
      %p266 = scmp.lt.s32.totalorder %s263, 7
      %s267 = scalar_select %p266, %s263, 7
      %s268 = smul.addr %s265, 8
      %s269 = sadd.s32 %s267, %s268
      %s270 = smul.addr %s269, 8
      %s271 = scalar_lea.vmem %s3, %s270
      %p272 = pneg %p121
      %p273 = pneg %p118
      %s274 = smul.u32 8, %s21
      %p275 = scmp.lt.s32.totalorder %s20, 1
      %s276 = scalar_select %p275, %s20, 1
      %p277 = scmp.lt.s32.totalorder %s274, 7
      %s278 = scalar_select %p277, %s274, 7
      %s279 = smul.addr %s276, 8
      %s280 = sadd.s32 %s278, %s279
      %s281 = smul.addr %s280, 8
      %s282 = scalar_lea.vmem %s4, %s281
      %p283 = pneg %p149
      %p284 = pneg %p146
      %p285 = pneg %p177
      %p286 = pneg %p174
      %s287 = smul.u32 8, %s21
      %p288 = scmp.lt.s32.totalorder %s20, 1
      %s289 = scalar_select %p288, %s20, 1
      %p290 = scmp.lt.s32.totalorder %s287, 7
      %s291 = scalar_select %p290, %s287, 7
      %s292 = smul.addr %s289, 8
      %s293 = sadd.s32 %s291, %s292
      %s294 = smul.addr %s293, 8
      %s295 = scalar_lea.vmem %s5, %s294
      %s296 = smul.u32 8, %s21
      %p297 = scmp.lt.s32.totalorder %s20, 1
      %s298 = scalar_select %p297, %s20, 1
      %p299 = scmp.lt.s32.totalorder %s296, 7
      %s300 = scalar_select %p299, %s296, 7
      %s301 = smul.addr %s298, 64
      %s302 = sadd.s32 %s300, %s301
      %s303 = smul.addr %s302, 4
      %s304 = scalar_lea.vmem %s0, %s303
      %s305 = smul.u32 8, %s21
      %s306 = smul.u32 8, %s21
      %p307 = scmp.lt.s32.totalorder %s20, 1
      %s308 = scalar_select %p307, %s20, 1
      %p309 = scmp.lt.s32.totalorder %s306, 7
      %s310 = scalar_select %p309, %s306, 7
      %s311 = smul.addr %s308, 8
      %s312 = sadd.s32 %s310, %s311
      %s313 = smul.addr %s312, 8
      %s314 = scalar_lea.vmem %s3, %s313
      %s315 = smul.u32 8, %s21
      %s316 = smul.u32 8, %s21
      %p317 = scmp.lt.s32.totalorder %s20, 1
      %s318 = scalar_select %p317, %s20, 1
      %p319 = scmp.lt.s32.totalorder %s316, 7
      %s320 = scalar_select %p319, %s316, 7
      %s321 = smul.addr %s318, 8
      %s322 = sadd.s32 %s320, %s321
      %s323 = smul.addr %s322, 8
      %s324 = scalar_lea.vmem %s4, %s323
      %s325 = smul.u32 8, %s21
      %s326 = smul.u32 8, %s21
      %p327 = scmp.lt.s32.totalorder %s20, 1
      %s328 = scalar_select %p327, %s20, 1
      %p329 = scmp.lt.s32.totalorder %s326, 7
      %s330 = scalar_select %p329, %s326, 7
      %s331 = smul.addr %s328, 8
      %s332 = sadd.s32 %s330, %s331
      %s333 = smul.addr %s332, 8
      %s334 = scalar_lea.vmem %s5, %s333
      %s335 = smul.u32 8, %s21
      %v337 = vld [vmem:[%s304] sm:$0xf]
      %v338 = vld [vmem:[%s304 + $0x4] sm:$0xf]
      %v339 = vld [vmem:[%s304 + $0x8] sm:$0xf]
      %v340 = vld [vmem:[%s304 + $0xc] sm:$0xf]
      %v341 = vld [vmem:[%s304 + $0x10] sm:$0xf]
      %v342 = vld [vmem:[%s304 + $0x14] sm:$0xf]
      %v343 = vld [vmem:[%s304 + $0x18] sm:$0xf]
      %v344 = vld [vmem:[%s304 + $0x1c] sm:$0xf]
      %v345 = vld [vmem:[%s1] sm:$0xf]
      %v346 = vld [vmem:[%s1 + $0x4] sm:$0xf]
      %v347 = vld [vmem:[%s1 + $0x8] sm:$0xf]
      %v348 = vld [vmem:[%s1 + $0xc] sm:$0xf]
      %v349 = vld [vmem:[%s1 + $0x10] sm:$0xf]
      %v350 = vld [vmem:[%s1 + $0x14] sm:$0xf]
      %v351 = vld [vmem:[%s1 + $0x18] sm:$0xf]
      %v352 = vld [vmem:[%s1 + $0x1c] sm:$0xf]
      %v353 = vld [vmem:[%s1 + $0x20] sm:$0x3]
      %v362 = vunpack.c.l.b16 %v337
      %v363 = vunpack.c.l.b16 %v338
      %v364 = vunpack.c.l.b16 %v339
      %v365 = vunpack.c.l.b16 %v340
      %v366 = vunpack.c.l.b16 %v341
      %v367 = vunpack.c.l.b16 %v342
      %v368 = vunpack.c.l.b16 %v343
      %v369 = vunpack.c.l.b16 %v344
      %v370 = vpack.c.b16 %v363, %v362
      %v371 = vpack.c.b16 %v365, %v364
      %v372 = vpack.c.b16 %v367, %v366
      %v373 = vpack.c.b16 %v369, %v368
      %v383 = vunpack.c.l.b16 %v345
      %v384 = vunpack.c.l.b16 %v346
      %v385 = vunpack.c.l.b16 %v347
      %v386 = vunpack.c.l.b16 %v348
      %v387 = vunpack.c.l.b16 %v349
      %v388 = vunpack.c.l.b16 %v350
      %v389 = vunpack.c.l.b16 %v351
      %v390 = vunpack.c.l.b16 %v352
      %v391 = vunpack.c.l.b16 %v353
      %v392 = vpack.c.b16 %v384, %v383
      %v393 = vpack.c.b16 %v386, %v385
      %v394 = vpack.c.b16 %v388, %v387
      %v395 = vpack.c.b16 %v390, %v389
      %v396 = vpack.c.b16 %v391, %v391
      %vm401 = vcmask 547840
      %v403 = vsel %vm401, %v370, 0
      %v406 = vsel %vm401, %v371, 0
      %v409 = vsel %vm401, %v372, 0
      %v412 = vsel %vm401, %v373, 0
      %vm414 = vcmask 1040384
      %vm415 = vcmask 1041408
      %v416 = vsel %vm414, 4294967295, 65535
      %v417 = vsel %vm415, %v416, 0
      %v419 = vand.u32 %v396, %v417
      %421 = vmatprep.subr.bf16.mxu0 0
      %422 = vmatpush1.bf16.msra.mxu0 %v392
      %423 = vmatprep.subr.bf16.mxu0 0
      %424 = vmatpush1.bf16.msra.mxu0 %v393
      %425 = vmatprep.subr.bf16.mxu0 0
      %426 = vmatpush1.bf16.msra.mxu0 %v394
      %427 = vmatprep.subr.bf16.mxu0 0
      %428 = vmatpush1.bf16.msra.mxu0 %v395
      %429 = vmatprep.subr.bf16.mxu0 0
      %430 = vmatpush1.bf16.msra.mxu0 %v419
      %431 = vmatprep.subr.bf16.mxu0 0
      %432 = vmatpush1.bf16.msra.mxu0 0
      %433 = vmatprep.subr.bf16.mxu0 0
      %434 = vmatpush1.bf16.msra.mxu0 0
      %435 = vmatprep.subr.bf16.mxu0 0
      %436 = vmatpush1.bf16.msra.mxu0 0
      %437 = vmatprep.subr.bf16.mxu0 0
      %438 = vmatpush1.bf16.msra.mxu0 0
      %439 = vmatprep.subr.bf16.mxu0 0
      %440 = vmatpush1.bf16.msra.mxu0 0
      %441 = vmatprep.subr.bf16.mxu0 0
      %442 = vmatpush1.bf16.msra.mxu0 0
      %443 = vmatprep.subr.bf16.mxu0 0
      %444 = vmatpush1.bf16.msra.mxu0 0
      %445 = vmatprep.subr.bf16.mxu0 0
      %446 = vmatpush1.bf16.msra.mxu0 0
      %447 = vmatprep.subr.bf16.mxu0 0
      %448 = vmatpush1.bf16.msra.mxu0 0
      %449 = vmatprep.subr.bf16.mxu0 0
      %450 = vmatpush1.bf16.msra.mxu0 0
      %451 = vmatprep.subr.bf16.mxu0 0
      %452 = vmatpush1.bf16.msra.mxu0 0
      %453 = vmatprep.mubr.bf16.mxu0 0
      %454 = vmatmul.mubr.bf16.gmra.mrb[0].mxu0 %v403
      %v455 = vpop.f32.mrb[0].mxu0
      %v456 = vadd.f32 0.0, %v455
      %v457 = vpop.f32.mrb[0].mxu0
      %v458 = vpop.f32.mrb[0].mxu0
      %v459 = vadd.f32 0.0, %v458
      %v460 = vpop.f32.mrb[0].mxu0
      %461 = vmatprep.mubr.bf16.mxu0 0
      %462 = vmatmul.mubr.bf16.gmra.mrb[0].mxu0 %v406
      %v463 = vpop.f32.mrb[0].mxu0
      %v464 = vadd.f32 0.0, %v463
      %v465 = vpop.f32.mrb[0].mxu0
      %v466 = vpop.f32.mrb[0].mxu0
      %v467 = vadd.f32 0.0, %v466
      %v468 = vpop.f32.mrb[0].mxu0
      %469 = vmatprep.mubr.bf16.mxu0 0
      %470 = vmatmul.mubr.bf16.gmra.mrb[0].mxu0 %v409
      %v471 = vpop.f32.mrb[0].mxu0
      %v472 = vadd.f32 0.0, %v471
      %v473 = vpop.f32.mrb[0].mxu0
      %v474 = vpop.f32.mrb[0].mxu0
      %v475 = vadd.f32 0.0, %v474
      %v476 = vpop.f32.mrb[0].mxu0
      %477 = vmatprep.mubr.bf16.mxu0 0
      %478 = vmatmul.mubr.bf16.gmra.mrb[0].mxu0 %v412
      %v479 = vpop.f32.mrb[0].mxu0
      %v480 = vadd.f32 0.0, %v479
      %v481 = vpop.f32.mrb[0].mxu0
      %v482 = vpop.f32.mrb[0].mxu0
      %v483 = vadd.f32 0.0, %v482
      %v484 = vpop.f32.mrb[0].mxu0
      %485 = vdwg.mxu0
      %s486 = scalar_lea.vmem %s304, 32
      %v487 = vld [vmem:[%s486] sm:$0xf]
      %v488 = vld [vmem:[%s486 + $0x4] sm:$0xf]
      %v489 = vld [vmem:[%s486 + $0x8] sm:$0xf]
      %v490 = vld [vmem:[%s486 + $0xc] sm:$0xf]
      %v491 = vld [vmem:[%s486 + $0x10] sm:$0xf]
      %v492 = vld [vmem:[%s486 + $0x14] sm:$0xf]
      %v493 = vld [vmem:[%s486 + $0x18] sm:$0xf]
      %v494 = vld [vmem:[%s486 + $0x1c] sm:$0xf]
      %v503 = vunpack.c.l.b16 %v487
      %v504 = vunpack.c.l.b16 %v488
      %v505 = vunpack.c.l.b16 %v489
      %v506 = vunpack.c.l.b16 %v490
      %v507 = vunpack.c.l.b16 %v491
      %v508 = vunpack.c.l.b16 %v492
      %v509 = vunpack.c.l.b16 %v493
      %v510 = vunpack.c.l.b16 %v494
      %v511 = vpack.c.b16 %v504, %v503
      %v512 = vpack.c.b16 %v506, %v505
      %v513 = vpack.c.b16 %v508, %v507
      %v514 = vpack.c.b16 %v510, %v509
      %v516 = vsel %vm401, %v511, 0
      %v519 = vsel %vm401, %v512, 0
      %v522 = vsel %vm401, %v513, 0
      %v525 = vsel %vm401, %v514, 0
      %527 = vmatprep.subr.bf16.mxu0 0
      %528 = vmatpush1.bf16.msra.mxu0 %v392
      %529 = vmatprep.subr.bf16.mxu0 0
      %530 = vmatpush1.bf16.msra.mxu0 %v393
      %531 = vmatprep.subr.bf16.mxu0 0
      %532 = vmatpush1.bf16.msra.mxu0 %v394
      %533 = vmatprep.subr.bf16.mxu0 0
      %534 = vmatpush1.bf16.msra.mxu0 %v395
      %535 = vmatprep.subr.bf16.mxu0 0
      %536 = vmatpush1.bf16.msra.mxu0 %v419
      %537 = vmatprep.subr.bf16.mxu0 0
      %538 = vmatpush1.bf16.msra.mxu0 0
      %539 = vmatprep.subr.bf16.mxu0 0
      %540 = vmatpush1.bf16.msra.mxu0 0
      %541 = vmatprep.subr.bf16.mxu0 0
      %542 = vmatpush1.bf16.msra.mxu0 0
      %543 = vmatprep.subr.bf16.mxu0 0
      %544 = vmatpush1.bf16.msra.mxu0 0
      %545 = vmatprep.subr.bf16.mxu0 0
      %546 = vmatpush1.bf16.msra.mxu0 0
      %547 = vmatprep.subr.bf16.mxu0 0
      %548 = vmatpush1.bf16.msra.mxu0 0
      %549 = vmatprep.subr.bf16.mxu0 0
      %550 = vmatpush1.bf16.msra.mxu0 0
      %551 = vmatprep.subr.bf16.mxu0 0
      %552 = vmatpush1.bf16.msra.mxu0 0
      %553 = vmatprep.subr.bf16.mxu0 0
      %554 = vmatpush1.bf16.msra.mxu0 0
      %555 = vmatprep.subr.bf16.mxu0 0
      %556 = vmatpush1.bf16.msra.mxu0 0
      %557 = vmatprep.subr.bf16.mxu0 0
      %558 = vmatpush1.bf16.msra.mxu0 0
      %559 = vmatprep.mubr.bf16.mxu0 0
      %560 = vmatmul.mubr.bf16.gmra.mrb[0].mxu0 %v516
      %v561 = vpop.f32.mrb[0].mxu0
      %v562 = vadd.f32 0.0, %v561
      %v563 = vpop.f32.mrb[0].mxu0
      %v564 = vpop.f32.mrb[0].mxu0
      %v565 = vadd.f32 0.0, %v564
      %v566 = vpop.f32.mrb[0].mxu0
      %567 = vmatprep.mubr.bf16.mxu0 0
      %568 = vmatmul.mubr.bf16.gmra.mrb[0].mxu0 %v519
      %v569 = vpop.f32.mrb[0].mxu0
      %v570 = vadd.f32 0.0, %v569
      %v571 = vpop.f32.mrb[0].mxu0
      %v572 = vpop.f32.mrb[0].mxu0
      %v573 = vadd.f32 0.0, %v572
      %v574 = vpop.f32.mrb[0].mxu0
      %575 = vmatprep.mubr.bf16.mxu0 0
      %576 = vmatmul.mubr.bf16.gmra.mrb[0].mxu0 %v522
      %v577 = vpop.f32.mrb[0].mxu0
      %v578 = vadd.f32 0.0, %v577
      %v579 = vpop.f32.mrb[0].mxu0
      %v580 = vpop.f32.mrb[0].mxu0
      %v581 = vadd.f32 0.0, %v580
      %v582 = vpop.f32.mrb[0].mxu0
      %583 = vmatprep.mubr.bf16.mxu0 0
      %584 = vmatmul.mubr.bf16.gmra.mrb[0].mxu0 %v525
      %v585 = vpop.f32.mrb[0].mxu0
      %v586 = vadd.f32 0.0, %v585
      %v587 = vpop.f32.mrb[0].mxu0
      %v588 = vpop.f32.mrb[0].mxu0
      %v589 = vadd.f32 0.0, %v588
      %v590 = vpop.f32.mrb[0].mxu0
      %591 = vdwg.mxu0
      %v592 = vmax.f32 %v456, %v562
      %v593 = vmax.f32 %v459, %v565
      %v594 = vmax.f32 %v464, %v570
      %v595 = vmax.f32 %v467, %v573
      %v596 = vmax.f32 %v472, %v578
      %v597 = vmax.f32 %v475, %v581
      %v598 = vmax.f32 %v480, %v586
      %v599 = vmax.f32 %v483, %v589
      %s600 = scalar_lea.vmem %s304, 64
      %v601 = vld [vmem:[%s600] sm:$0xf]
      %v602 = vld [vmem:[%s600 + $0x4] sm:$0xf]
      %v603 = vld [vmem:[%s600 + $0x8] sm:$0xf]
      %v604 = vld [vmem:[%s600 + $0xc] sm:$0xf]
      %v605 = vld [vmem:[%s600 + $0x10] sm:$0xf]
      %v606 = vld [vmem:[%s600 + $0x14] sm:$0xf]
      %v607 = vld [vmem:[%s600 + $0x18] sm:$0xf]
      %v608 = vld [vmem:[%s600 + $0x1c] sm:$0xf]
      %v617 = vunpack.c.l.b16 %v601
      %v618 = vunpack.c.l.b16 %v602
      %v619 = vunpack.c.l.b16 %v603
      %v620 = vunpack.c.l.b16 %v604
      %v621 = vunpack.c.l.b16 %v605
      %v622 = vunpack.c.l.b16 %v606
      %v623 = vunpack.c.l.b16 %v607
      %v624 = vunpack.c.l.b16 %v608
      %v625 = vpack.c.b16 %v618, %v617
      %v626 = vpack.c.b16 %v620, %v619
      %v627 = vpack.c.b16 %v622, %v621
      %v628 = vpack.c.b16 %v624, %v623
      %v630 = vsel %vm401, %v625, 0
      %v633 = vsel %vm401, %v626, 0
      %v636 = vsel %vm401, %v627, 0
      %v639 = vsel %vm401, %v628, 0
      %641 = vmatprep.subr.bf16.mxu0 0
      %642 = vmatpush1.bf16.msra.mxu0 %v392
      %643 = vmatprep.subr.bf16.mxu0 0
      %644 = vmatpush1.bf16.msra.mxu0 %v393
      %645 = vmatprep.subr.bf16.mxu0 0
      %646 = vmatpush1.bf16.msra.mxu0 %v394
      %647 = vmatprep.subr.bf16.mxu0 0
      %648 = vmatpush1.bf16.msra.mxu0 %v395
      %649 = vmatprep.subr.bf16.mxu0 0
      %650 = vmatpush1.bf16.msra.mxu0 %v419
      %651 = vmatprep.subr.bf16.mxu0 0
      %652 = vmatpush1.bf16.msra.mxu0 0
      %653 = vmatprep.subr.bf16.mxu0 0
      %654 = vmatpush1.bf16.msra.mxu0 0
      %655 = vmatprep.subr.bf16.mxu0 0
      %656 = vmatpush1.bf16.msra.mxu0 0
      %657 = vmatprep.subr.bf16.mxu0 0
      %658 = vmatpush1.bf16.msra.mxu0 0
      %659 = vmatprep.subr.bf16.mxu0 0
      %660 = vmatpush1.bf16.msra.mxu0 0
      %661 = vmatprep.subr.bf16.mxu0 0
      %662 = vmatpush1.bf16.msra.mxu0 0
      %663 = vmatprep.subr.bf16.mxu0 0
      %664 = vmatpush1.bf16.msra.mxu0 0
      %665 = vmatprep.subr.bf16.mxu0 0
      %666 = vmatpush1.bf16.msra.mxu0 0
      %667 = vmatprep.subr.bf16.mxu0 0
      %668 = vmatpush1.bf16.msra.mxu0 0
      %669 = vmatprep.subr.bf16.mxu0 0
      %670 = vmatpush1.bf16.msra.mxu0 0
      %671 = vmatprep.subr.bf16.mxu0 0
      %672 = vmatpush1.bf16.msra.mxu0 0
      %673 = vmatprep.mubr.bf16.mxu0 0
      %674 = vmatmul.mubr.bf16.gmra.mrb[0].mxu0 %v630
      %v675 = vpop.f32.mrb[0].mxu0
      %v676 = vadd.f32 0.0, %v675
      %v677 = vpop.f32.mrb[0].mxu0
      %v678 = vpop.f32.mrb[0].mxu0
      %v679 = vadd.f32 0.0, %v678
      %v680 = vpop.f32.mrb[0].mxu0
      %681 = vmatprep.mubr.bf16.mxu0 0
      %682 = vmatmul.mubr.bf16.gmra.mrb[0].mxu0 %v633
      %v683 = vpop.f32.mrb[0].mxu0
      %v684 = vadd.f32 0.0, %v683
      %v685 = vpop.f32.mrb[0].mxu0
      %v686 = vpop.f32.mrb[0].mxu0
      %v687 = vadd.f32 0.0, %v686
      %v688 = vpop.f32.mrb[0].mxu0
      %689 = vmatprep.mubr.bf16.mxu0 0
      %690 = vmatmul.mubr.bf16.gmra.mrb[0].mxu0 %v636
      %v691 = vpop.f32.mrb[0].mxu0
      %v692 = vadd.f32 0.0, %v691
      %v693 = vpop.f32.mrb[0].mxu0
      %v694 = vpop.f32.mrb[0].mxu0
      %v695 = vadd.f32 0.0, %v694
      %v696 = vpop.f32.mrb[0].mxu0
      %697 = vmatprep.mubr.bf16.mxu0 0
      %698 = vmatmul.mubr.bf16.gmra.mrb[0].mxu0 %v639
      %v699 = vpop.f32.mrb[0].mxu0
      %v700 = vadd.f32 0.0, %v699
      %v701 = vpop.f32.mrb[0].mxu0
      %v702 = vpop.f32.mrb[0].mxu0
      %v703 = vadd.f32 0.0, %v702
      %v704 = vpop.f32.mrb[0].mxu0
      %705 = vdwg.mxu0
      %v706 = vmax.f32 %v592, %v676
      %v707 = vmax.f32 %v593, %v679
      %v708 = vmax.f32 %v594, %v684
      %v709 = vmax.f32 %v595, %v687
      %v710 = vmax.f32 %v596, %v692
      %v711 = vmax.f32 %v597, %v695
      %v712 = vmax.f32 %v598, %v700
      %v713 = vmax.f32 %v599, %v703
      %s714 = scalar_lea.vmem %s304, 96
      %v715 = vld [vmem:[%s714] sm:$0xf]
      %v716 = vld [vmem:[%s714 + $0x4] sm:$0xf]
      %v717 = vld [vmem:[%s714 + $0x8] sm:$0xf]
      %v718 = vld [vmem:[%s714 + $0xc] sm:$0xf]
      %v719 = vld [vmem:[%s714 + $0x10] sm:$0xf]
      %v720 = vld [vmem:[%s714 + $0x14] sm:$0xf]
      %v721 = vld [vmem:[%s714 + $0x18] sm:$0xf]
      %v722 = vld [vmem:[%s714 + $0x1c] sm:$0xf]
      %v731 = vunpack.c.l.b16 %v715
      %v732 = vunpack.c.l.b16 %v716
      %v733 = vunpack.c.l.b16 %v717
      %v734 = vunpack.c.l.b16 %v718
      %v735 = vunpack.c.l.b16 %v719
      %v736 = vunpack.c.l.b16 %v720
      %v737 = vunpack.c.l.b16 %v721
      %v738 = vunpack.c.l.b16 %v722
      %v739 = vpack.c.b16 %v732, %v731
      %v740 = vpack.c.b16 %v734, %v733
      %v741 = vpack.c.b16 %v736, %v735
      %v742 = vpack.c.b16 %v738, %v737
      %v744 = vsel %vm401, %v739, 0
      %v747 = vsel %vm401, %v740, 0
      %v750 = vsel %vm401, %v741, 0
      %v753 = vsel %vm401, %v742, 0
      %755 = vmatprep.subr.bf16.mxu0 0
      %756 = vmatpush1.bf16.msra.mxu0 %v392
      %757 = vmatprep.subr.bf16.mxu0 0
      %758 = vmatpush1.bf16.msra.mxu0 %v393
      %759 = vmatprep.subr.bf16.mxu0 0
      %760 = vmatpush1.bf16.msra.mxu0 %v394
      %761 = vmatprep.subr.bf16.mxu0 0
      %762 = vmatpush1.bf16.msra.mxu0 %v395
      %763 = vmatprep.subr.bf16.mxu0 0
      %764 = vmatpush1.bf16.msra.mxu0 %v419
      %765 = vmatprep.subr.bf16.mxu0 0
      %766 = vmatpush1.bf16.msra.mxu0 0
      %767 = vmatprep.subr.bf16.mxu0 0
      %768 = vmatpush1.bf16.msra.mxu0 0
      %769 = vmatprep.subr.bf16.mxu0 0
      %770 = vmatpush1.bf16.msra.mxu0 0
      %771 = vmatprep.subr.bf16.mxu0 0
      %772 = vmatpush1.bf16.msra.mxu0 0
      %773 = vmatprep.subr.bf16.mxu0 0
      %774 = vmatpush1.bf16.msra.mxu0 0
      %775 = vmatprep.subr.bf16.mxu0 0
      %776 = vmatpush1.bf16.msra.mxu0 0
      %777 = vmatprep.subr.bf16.mxu0 0
      %778 = vmatpush1.bf16.msra.mxu0 0
      %779 = vmatprep.subr.bf16.mxu0 0
      %780 = vmatpush1.bf16.msra.mxu0 0
      %781 = vmatprep.subr.bf16.mxu0 0
      %782 = vmatpush1.bf16.msra.mxu0 0
      %783 = vmatprep.subr.bf16.mxu0 0
      %784 = vmatpush1.bf16.msra.mxu0 0
      %785 = vmatprep.subr.bf16.mxu0 0
      %786 = vmatpush1.bf16.msra.mxu0 0
      %787 = vmatprep.mubr.bf16.mxu0 0
      %788 = vmatmul.mubr.bf16.gmra.mrb[0].mxu0 %v744
      %v789 = vpop.f32.mrb[0].mxu0
      %v790 = vadd.f32 0.0, %v789
      %v791 = vpop.f32.mrb[0].mxu0
      %v792 = vpop.f32.mrb[0].mxu0
      %v793 = vadd.f32 0.0, %v792
      %v794 = vpop.f32.mrb[0].mxu0
      %795 = vmatprep.mubr.bf16.mxu0 0
      %796 = vmatmul.mubr.bf16.gmra.mrb[0].mxu0 %v747
      %v797 = vpop.f32.mrb[0].mxu0
      %v798 = vadd.f32 0.0, %v797
      %v799 = vpop.f32.mrb[0].mxu0
      %v800 = vpop.f32.mrb[0].mxu0
      %v801 = vadd.f32 0.0, %v800
      %v802 = vpop.f32.mrb[0].mxu0
      %803 = vmatprep.mubr.bf16.mxu0 0
      %804 = vmatmul.mubr.bf16.gmra.mrb[0].mxu0 %v750
      %v805 = vpop.f32.mrb[0].mxu0
      %v806 = vadd.f32 0.0, %v805
      %v807 = vpop.f32.mrb[0].mxu0
      %v808 = vpop.f32.mrb[0].mxu0
      %v809 = vadd.f32 0.0, %v808
      %v810 = vpop.f32.mrb[0].mxu0
      %811 = vmatprep.mubr.bf16.mxu0 0
      %812 = vmatmul.mubr.bf16.gmra.mrb[0].mxu0 %v753
      %v813 = vpop.f32.mrb[0].mxu0
      %v814 = vadd.f32 0.0, %v813
      %v815 = vpop.f32.mrb[0].mxu0
      %v816 = vpop.f32.mrb[0].mxu0
      %v817 = vadd.f32 0.0, %v816
      %v818 = vpop.f32.mrb[0].mxu0
      %819 = vdwg.mxu0
      %v820 = vmax.f32 %v706, %v790
      %v821 = vmax.f32 %v707, %v793
      %v822 = vmax.f32 %v708, %v798
      %v823 = vmax.f32 %v709, %v801
      %v824 = vmax.f32 %v710, %v806
      %v825 = vmax.f32 %v711, %v809
      %v826 = vmax.f32 %v712, %v814
      %v827 = vmax.f32 %v713, %v817
      %s828 = scalar_lea.vmem %s304, 128
      %v829 = vld [vmem:[%s828] sm:$0xf]
      %v830 = vld [vmem:[%s828 + $0x4] sm:$0xf]
      %v831 = vld [vmem:[%s828 + $0x8] sm:$0xf]
      %v832 = vld [vmem:[%s828 + $0xc] sm:$0xf]
      %v833 = vld [vmem:[%s828 + $0x10] sm:$0xf]
      %v834 = vld [vmem:[%s828 + $0x14] sm:$0xf]
      %v835 = vld [vmem:[%s828 + $0x18] sm:$0xf]
      %v836 = vld [vmem:[%s828 + $0x1c] sm:$0xf]
      %v845 = vunpack.c.l.b16 %v829
      %v846 = vunpack.c.l.b16 %v830
      %v847 = vunpack.c.l.b16 %v831
      %v848 = vunpack.c.l.b16 %v832
      %v849 = vunpack.c.l.b16 %v833
      %v850 = vunpack.c.l.b16 %v834
      %v851 = vunpack.c.l.b16 %v835
      %v852 = vunpack.c.l.b16 %v836
      %v853 = vpack.c.b16 %v846, %v845
      %v854 = vpack.c.b16 %v848, %v847
      %v855 = vpack.c.b16 %v850, %v849
      %v856 = vpack.c.b16 %v852, %v851
      %v858 = vsel %vm401, %v853, 0
      %v861 = vsel %vm401, %v854, 0
      %v864 = vsel %vm401, %v855, 0
      %v867 = vsel %vm401, %v856, 0
      %869 = vmatprep.subr.bf16.mxu0 0
      %870 = vmatpush1.bf16.msra.mxu0 %v392
      %871 = vmatprep.subr.bf16.mxu0 0
      %872 = vmatpush1.bf16.msra.mxu0 %v393
      %873 = vmatprep.subr.bf16.mxu0 0
      %874 = vmatpush1.bf16.msra.mxu0 %v394
      %875 = vmatprep.subr.bf16.mxu0 0
      %876 = vmatpush1.bf16.msra.mxu0 %v395
      %877 = vmatprep.subr.bf16.mxu0 0
      %878 = vmatpush1.bf16.msra.mxu0 %v419
      %879 = vmatprep.subr.bf16.mxu0 0
      %880 = vmatpush1.bf16.msra.mxu0 0
      %881 = vmatprep.subr.bf16.mxu0 0
      %882 = vmatpush1.bf16.msra.mxu0 0
      %883 = vmatprep.subr.bf16.mxu0 0
      %884 = vmatpush1.bf16.msra.mxu0 0
      %885 = vmatprep.subr.bf16.mxu0 0
      %886 = vmatpush1.bf16.msra.mxu0 0
      %887 = vmatprep.subr.bf16.mxu0 0
      %888 = vmatpush1.bf16.msra.mxu0 0
      %889 = vmatprep.subr.bf16.mxu0 0
      %890 = vmatpush1.bf16.msra.mxu0 0
      %891 = vmatprep.subr.bf16.mxu0 0
      %892 = vmatpush1.bf16.msra.mxu0 0
      %893 = vmatprep.subr.bf16.mxu0 0
      %894 = vmatpush1.bf16.msra.mxu0 0
      %895 = vmatprep.subr.bf16.mxu0 0
      %896 = vmatpush1.bf16.msra.mxu0 0
      %897 = vmatprep.subr.bf16.mxu0 0
      %898 = vmatpush1.bf16.msra.mxu0 0
      %899 = vmatprep.subr.bf16.mxu0 0
      %900 = vmatpush1.bf16.msra.mxu0 0
      %901 = vmatprep.mubr.bf16.mxu0 0
      %902 = vmatmul.mubr.bf16.gmra.mrb[0].mxu0 %v858
      %v903 = vpop.f32.mrb[0].mxu0
      %v904 = vadd.f32 0.0, %v903
      %v905 = vpop.f32.mrb[0].mxu0
      %v906 = vpop.f32.mrb[0].mxu0
      %v907 = vadd.f32 0.0, %v906
      %v908 = vpop.f32.mrb[0].mxu0
      %909 = vmatprep.mubr.bf16.mxu0 0
      %910 = vmatmul.mubr.bf16.gmra.mrb[0].mxu0 %v861
      %v911 = vpop.f32.mrb[0].mxu0
      %v912 = vadd.f32 0.0, %v911
      %v913 = vpop.f32.mrb[0].mxu0
      %v914 = vpop.f32.mrb[0].mxu0
      %v915 = vadd.f32 0.0, %v914
      %v916 = vpop.f32.mrb[0].mxu0
      %917 = vmatprep.mubr.bf16.mxu0 0
      %918 = vmatmul.mubr.bf16.gmra.mrb[0].mxu0 %v864
      %v919 = vpop.f32.mrb[0].mxu0
      %v920 = vadd.f32 0.0, %v919
      %v921 = vpop.f32.mrb[0].mxu0
      %v922 = vpop.f32.mrb[0].mxu0
      %v923 = vadd.f32 0.0, %v922
      %v924 = vpop.f32.mrb[0].mxu0
      %925 = vmatprep.mubr.bf16.mxu0 0
      %926 = vmatmul.mubr.bf16.gmra.mrb[0].mxu0 %v867
      %v927 = vpop.f32.mrb[0].mxu0
      %v928 = vadd.f32 0.0, %v927
      %v929 = vpop.f32.mrb[0].mxu0
      %v930 = vpop.f32.mrb[0].mxu0
      %v931 = vadd.f32 0.0, %v930
      %v932 = vpop.f32.mrb[0].mxu0
      %933 = vdwg.mxu0
      %v934 = vmax.f32 %v820, %v904
      %v935 = vmax.f32 %v821, %v907
      %v936 = vmax.f32 %v822, %v912
      %v937 = vmax.f32 %v823, %v915
      %v938 = vmax.f32 %v824, %v920
      %v939 = vmax.f32 %v825, %v923
      %v940 = vmax.f32 %v826, %v928
      %v941 = vmax.f32 %v827, %v931
      %s942 = scalar_lea.vmem %s304, 160
      %v943 = vld [vmem:[%s942] sm:$0xf]
      %v944 = vld [vmem:[%s942 + $0x4] sm:$0xf]
      %v945 = vld [vmem:[%s942 + $0x8] sm:$0xf]
      %v946 = vld [vmem:[%s942 + $0xc] sm:$0xf]
      %v947 = vld [vmem:[%s942 + $0x10] sm:$0xf]
      %v948 = vld [vmem:[%s942 + $0x14] sm:$0xf]
      %v949 = vld [vmem:[%s942 + $0x18] sm:$0xf]
      %v950 = vld [vmem:[%s942 + $0x1c] sm:$0xf]
      %v959 = vunpack.c.l.b16 %v943
      %v960 = vunpack.c.l.b16 %v944
      %v961 = vunpack.c.l.b16 %v945
      %v962 = vunpack.c.l.b16 %v946
      %v963 = vunpack.c.l.b16 %v947
      %v964 = vunpack.c.l.b16 %v948
      %v965 = vunpack.c.l.b16 %v949
      %v966 = vunpack.c.l.b16 %v950
      %v967 = vpack.c.b16 %v960, %v959
      %v968 = vpack.c.b16 %v962, %v961
      %v969 = vpack.c.b16 %v964, %v963
      %v970 = vpack.c.b16 %v966, %v965
      %v972 = vsel %vm401, %v967, 0
      %v975 = vsel %vm401, %v968, 0
      %v978 = vsel %vm401, %v969, 0
      %v981 = vsel %vm401, %v970, 0
      %983 = vmatprep.subr.bf16.mxu0 0
      %984 = vmatpush1.bf16.msra.mxu0 %v392
      %985 = vmatprep.subr.bf16.mxu0 0
      %986 = vmatpush1.bf16.msra.mxu0 %v393
      %987 = vmatprep.subr.bf16.mxu0 0
      %988 = vmatpush1.bf16.msra.mxu0 %v394
      %989 = vmatprep.subr.bf16.mxu0 0
      %990 = vmatpush1.bf16.msra.mxu0 %v395
      %991 = vmatprep.subr.bf16.mxu0 0
      %992 = vmatpush1.bf16.msra.mxu0 %v419
      %993 = vmatprep.subr.bf16.mxu0 0
      %994 = vmatpush1.bf16.msra.mxu0 0
      %995 = vmatprep.subr.bf16.mxu0 0
      %996 = vmatpush1.bf16.msra.mxu0 0
      %997 = vmatprep.subr.bf16.mxu0 0
      %998 = vmatpush1.bf16.msra.mxu0 0
      %999 = vmatprep.subr.bf16.mxu0 0
      %1000 = vmatpush1.bf16.msra.mxu0 0
      %1001 = vmatprep.subr.bf16.mxu0 0
      %1002 = vmatpush1.bf16.msra.mxu0 0
      %1003 = vmatprep.subr.bf16.mxu0 0
      %1004 = vmatpush1.bf16.msra.mxu0 0
      %1005 = vmatprep.subr.bf16.mxu0 0
      %1006 = vmatpush1.bf16.msra.mxu0 0
      %1007 = vmatprep.subr.bf16.mxu0 0
      %1008 = vmatpush1.bf16.msra.mxu0 0
      %1009 = vmatprep.subr.bf16.mxu0 0
      %1010 = vmatpush1.bf16.msra.mxu0 0
      %1011 = vmatprep.subr.bf16.mxu0 0
      %1012 = vmatpush1.bf16.msra.mxu0 0
      %1013 = vmatprep.subr.bf16.mxu0 0
      %1014 = vmatpush1.bf16.msra.mxu0 0
      %1015 = vmatprep.mubr.bf16.mxu0 0
      %1016 = vmatmul.mubr.bf16.gmra.mrb[0].mxu0 %v972
      %v1017 = vpop.f32.mrb[0].mxu0
      %v1018 = vadd.f32 0.0, %v1017
      %v1019 = vpop.f32.mrb[0].mxu0
      %v1020 = vpop.f32.mrb[0].mxu0
      %v1021 = vadd.f32 0.0, %v1020
      %v1022 = vpop.f32.mrb[0].mxu0
      %1023 = vmatprep.mubr.bf16.mxu0 0
      %1024 = vmatmul.mubr.bf16.gmra.mrb[0].mxu0 %v975
      %v1025 = vpop.f32.mrb[0].mxu0
      %v1026 = vadd.f32 0.0, %v1025
      %v1027 = vpop.f32.mrb[0].mxu0
      %v1028 = vpop.f32.mrb[0].mxu0
      %v1029 = vadd.f32 0.0, %v1028
      %v1030 = vpop.f32.mrb[0].mxu0
      %1031 = vmatprep.mubr.bf16.mxu0 0
      %1032 = vmatmul.mubr.bf16.gmra.mrb[0].mxu0 %v978
      %v1033 = vpop.f32.mrb[0].mxu0
      %v1034 = vadd.f32 0.0, %v1033
      %v1035 = vpop.f32.mrb[0].mxu0
      %v1036 = vpop.f32.mrb[0].mxu0
      %v1037 = vadd.f32 0.0, %v1036
      %v1038 = vpop.f32.mrb[0].mxu0
      %1039 = vmatprep.mubr.bf16.mxu0 0
      %1040 = vmatmul.mubr.bf16.gmra.mrb[0].mxu0 %v981
      %v1041 = vpop.f32.mrb[0].mxu0
      %v1042 = vadd.f32 0.0, %v1041
      %v1043 = vpop.f32.mrb[0].mxu0
      %v1044 = vpop.f32.mrb[0].mxu0
      %v1045 = vadd.f32 0.0, %v1044
      %v1046 = vpop.f32.mrb[0].mxu0
      %1047 = vdwg.mxu0
      %v1048 = vmax.f32 %v934, %v1018
      %v1049 = vmax.f32 %v935, %v1021
      %v1050 = vmax.f32 %v936, %v1026
      %v1051 = vmax.f32 %v937, %v1029
      %v1052 = vmax.f32 %v938, %v1034
      %v1053 = vmax.f32 %v939, %v1037
      %v1054 = vmax.f32 %v940, %v1042
      %v1055 = vmax.f32 %v941, %v1045
      %s1056 = scalar_lea.vmem %s304, 192
      %v1057 = vld [vmem:[%s1056] sm:$0xf]
      %v1058 = vld [vmem:[%s1056 + $0x4] sm:$0xf]
      %v1059 = vld [vmem:[%s1056 + $0x8] sm:$0xf]
      %v1060 = vld [vmem:[%s1056 + $0xc] sm:$0xf]
      %v1061 = vld [vmem:[%s1056 + $0x10] sm:$0xf]
      %v1062 = vld [vmem:[%s1056 + $0x14] sm:$0xf]
      %v1063 = vld [vmem:[%s1056 + $0x18] sm:$0xf]
      %v1064 = vld [vmem:[%s1056 + $0x1c] sm:$0xf]
      %v1073 = vunpack.c.l.b16 %v1057
      %v1074 = vunpack.c.l.b16 %v1058
      %v1075 = vunpack.c.l.b16 %v1059
      %v1076 = vunpack.c.l.b16 %v1060
      %v1077 = vunpack.c.l.b16 %v1061
      %v1078 = vunpack.c.l.b16 %v1062
      %v1079 = vunpack.c.l.b16 %v1063
      %v1080 = vunpack.c.l.b16 %v1064
      %v1081 = vpack.c.b16 %v1074, %v1073
      %v1082 = vpack.c.b16 %v1076, %v1075
      %v1083 = vpack.c.b16 %v1078, %v1077
      %v1084 = vpack.c.b16 %v1080, %v1079
      %v1086 = vsel %vm401, %v1081, 0
      %v1089 = vsel %vm401, %v1082, 0
      %v1092 = vsel %vm401, %v1083, 0
      %v1095 = vsel %vm401, %v1084, 0
      %1097 = vmatprep.subr.bf16.mxu0 0
      %1098 = vmatpush1.bf16.msra.mxu0 %v392
      %1099 = vmatprep.subr.bf16.mxu0 0
      %1100 = vmatpush1.bf16.msra.mxu0 %v393
      %1101 = vmatprep.subr.bf16.mxu0 0
      %1102 = vmatpush1.bf16.msra.mxu0 %v394
      %1103 = vmatprep.subr.bf16.mxu0 0
      %1104 = vmatpush1.bf16.msra.mxu0 %v395
      %1105 = vmatprep.subr.bf16.mxu0 0
      %1106 = vmatpush1.bf16.msra.mxu0 %v419
      %1107 = vmatprep.subr.bf16.mxu0 0
      %1108 = vmatpush1.bf16.msra.mxu0 0
      %1109 = vmatprep.subr.bf16.mxu0 0
      %1110 = vmatpush1.bf16.msra.mxu0 0
      %1111 = vmatprep.subr.bf16.mxu0 0
      %1112 = vmatpush1.bf16.msra.mxu0 0
      %1113 = vmatprep.subr.bf16.mxu0 0
      %1114 = vmatpush1.bf16.msra.mxu0 0
      %1115 = vmatprep.subr.bf16.mxu0 0
      %1116 = vmatpush1.bf16.msra.mxu0 0
      %1117 = vmatprep.subr.bf16.mxu0 0
      %1118 = vmatpush1.bf16.msra.mxu0 0
      %1119 = vmatprep.subr.bf16.mxu0 0
      %1120 = vmatpush1.bf16.msra.mxu0 0
      %1121 = vmatprep.subr.bf16.mxu0 0
      %1122 = vmatpush1.bf16.msra.mxu0 0
      %1123 = vmatprep.subr.bf16.mxu0 0
      %1124 = vmatpush1.bf16.msra.mxu0 0
      %1125 = vmatprep.subr.bf16.mxu0 0
      %1126 = vmatpush1.bf16.msra.mxu0 0
      %1127 = vmatprep.subr.bf16.mxu0 0
      %1128 = vmatpush1.bf16.msra.mxu0 0
      %1129 = vmatprep.mubr.bf16.mxu0 0
      %1130 = vmatmul.mubr.bf16.gmra.mrb[0].mxu0 %v1086
      %v1131 = vpop.f32.mrb[0].mxu0
      %v1132 = vadd.f32 0.0, %v1131
      %v1133 = vpop.f32.mrb[0].mxu0
      %v1134 = vpop.f32.mrb[0].mxu0
      %v1135 = vadd.f32 0.0, %v1134
      %v1136 = vpop.f32.mrb[0].mxu0
      %1137 = vmatprep.mubr.bf16.mxu0 0
      %1138 = vmatmul.mubr.bf16.gmra.mrb[0].mxu0 %v1089
      %v1139 = vpop.f32.mrb[0].mxu0
      %v1140 = vadd.f32 0.0, %v1139
      %v1141 = vpop.f32.mrb[0].mxu0
      %v1142 = vpop.f32.mrb[0].mxu0
      %v1143 = vadd.f32 0.0, %v1142
      %v1144 = vpop.f32.mrb[0].mxu0
      %1145 = vmatprep.mubr.bf16.mxu0 0
      %1146 = vmatmul.mubr.bf16.gmra.mrb[0].mxu0 %v1092
      %v1147 = vpop.f32.mrb[0].mxu0
      %v1148 = vadd.f32 0.0, %v1147
      %v1149 = vpop.f32.mrb[0].mxu0
      %v1150 = vpop.f32.mrb[0].mxu0
      %v1151 = vadd.f32 0.0, %v1150
      %v1152 = vpop.f32.mrb[0].mxu0
      %1153 = vmatprep.mubr.bf16.mxu0 0
      %1154 = vmatmul.mubr.bf16.gmra.mrb[0].mxu0 %v1095
      %v1155 = vpop.f32.mrb[0].mxu0
      %v1156 = vadd.f32 0.0, %v1155
      %v1157 = vpop.f32.mrb[0].mxu0
      %v1158 = vpop.f32.mrb[0].mxu0
      %v1159 = vadd.f32 0.0, %v1158
      %v1160 = vpop.f32.mrb[0].mxu0
      %1161 = vdwg.mxu0
      %v1162 = vmax.f32 %v1048, %v1132
      %v1163 = vmax.f32 %v1049, %v1135
      %v1164 = vmax.f32 %v1050, %v1140
      %v1165 = vmax.f32 %v1051, %v1143
      %v1166 = vmax.f32 %v1052, %v1148
      %v1167 = vmax.f32 %v1053, %v1151
      %v1168 = vmax.f32 %v1054, %v1156
      %v1169 = vmax.f32 %v1055, %v1159
      %s1170 = scalar_lea.vmem %s304, 224
      %v1171 = vld [vmem:[%s1170] sm:$0xf]
      %v1172 = vld [vmem:[%s1170 + $0x4] sm:$0xf]
      %v1173 = vld [vmem:[%s1170 + $0x8] sm:$0xf]
      %v1174 = vld [vmem:[%s1170 + $0xc] sm:$0xf]
      %v1175 = vld [vmem:[%s1170 + $0x10] sm:$0xf]
      %v1176 = vld [vmem:[%s1170 + $0x14] sm:$0xf]
      %v1177 = vld [vmem:[%s1170 + $0x18] sm:$0xf]
      %v1178 = vld [vmem:[%s1170 + $0x1c] sm:$0xf]
      %v1187 = vunpack.c.l.b16 %v1171
      %v1188 = vunpack.c.l.b16 %v1172
      %v1189 = vunpack.c.l.b16 %v1173
      %v1190 = vunpack.c.l.b16 %v1174
      %v1191 = vunpack.c.l.b16 %v1175
      %v1192 = vunpack.c.l.b16 %v1176
      %v1193 = vunpack.c.l.b16 %v1177
      %v1194 = vunpack.c.l.b16 %v1178
      %v1195 = vpack.c.b16 %v1188, %v1187
      %v1196 = vpack.c.b16 %v1190, %v1189
      %v1197 = vpack.c.b16 %v1192, %v1191
      %v1198 = vpack.c.b16 %v1194, %v1193
      %v1200 = vsel %vm401, %v1195, 0
      %v1203 = vsel %vm401, %v1196, 0
      %v1206 = vsel %vm401, %v1197, 0
      %v1209 = vsel %vm401, %v1198, 0
      %1211 = vmatprep.subr.bf16.mxu0 0
      %1212 = vmatpush1.bf16.msra.mxu0 %v392
      %1213 = vmatprep.subr.bf16.mxu0 0
      %1214 = vmatpush1.bf16.msra.mxu0 %v393
      %1215 = vmatprep.subr.bf16.mxu0 0
      %1216 = vmatpush1.bf16.msra.mxu0 %v394
      %1217 = vmatprep.subr.bf16.mxu0 0
      %1218 = vmatpush1.bf16.msra.mxu0 %v395
      %1219 = vmatprep.subr.bf16.mxu0 0
      %1220 = vmatpush1.bf16.msra.mxu0 %v419
      %1221 = vmatprep.subr.bf16.mxu0 0
      %1222 = vmatpush1.bf16.msra.mxu0 0
      %1223 = vmatprep.subr.bf16.mxu0 0
      %1224 = vmatpush1.bf16.msra.mxu0 0
      %1225 = vmatprep.subr.bf16.mxu0 0
      %1226 = vmatpush1.bf16.msra.mxu0 0
      %1227 = vmatprep.subr.bf16.mxu0 0
      %1228 = vmatpush1.bf16.msra.mxu0 0
      %1229 = vmatprep.subr.bf16.mxu0 0
      %1230 = vmatpush1.bf16.msra.mxu0 0
      %1231 = vmatprep.subr.bf16.mxu0 0
      %1232 = vmatpush1.bf16.msra.mxu0 0
      %1233 = vmatprep.subr.bf16.mxu0 0
      %1234 = vmatpush1.bf16.msra.mxu0 0
      %1235 = vmatprep.subr.bf16.mxu0 0
      %1236 = vmatpush1.bf16.msra.mxu0 0
      %1237 = vmatprep.subr.bf16.mxu0 0
      %1238 = vmatpush1.bf16.msra.mxu0 0
      %1239 = vmatprep.subr.bf16.mxu0 0
      %1240 = vmatpush1.bf16.msra.mxu0 0
      %1241 = vmatprep.subr.bf16.mxu0 0
      %1242 = vmatpush1.bf16.msra.mxu0 0
      %1243 = vmatprep.mubr.bf16.mxu0 0
      %1244 = vmatmul.mubr.bf16.gmra.mrb[0].mxu0 %v1200
      %v1245 = vpop.f32.mrb[0].mxu0
      %v1246 = vadd.f32 0.0, %v1245
      %v1247 = vpop.f32.mrb[0].mxu0
      %v1248 = vpop.f32.mrb[0].mxu0
      %v1249 = vadd.f32 0.0, %v1248
      %v1250 = vpop.f32.mrb[0].mxu0
      %1251 = vmatprep.mubr.bf16.mxu0 0
      %1252 = vmatmul.mubr.bf16.gmra.mrb[0].mxu0 %v1203
      %v1253 = vpop.f32.mrb[0].mxu0
      %v1254 = vadd.f32 0.0, %v1253
      %v1255 = vpop.f32.mrb[0].mxu0
      %v1256 = vpop.f32.mrb[0].mxu0
      %v1257 = vadd.f32 0.0, %v1256
      %v1258 = vpop.f32.mrb[0].mxu0
      %1259 = vmatprep.mubr.bf16.mxu0 0
      %1260 = vmatmul.mubr.bf16.gmra.mrb[0].mxu0 %v1206
      %v1261 = vpop.f32.mrb[0].mxu0
      %v1262 = vadd.f32 0.0, %v1261
      %v1263 = vpop.f32.mrb[0].mxu0
      %v1264 = vpop.f32.mrb[0].mxu0
      %v1265 = vadd.f32 0.0, %v1264
      %v1266 = vpop.f32.mrb[0].mxu0
      %1267 = vmatprep.mubr.bf16.mxu0 0
      %1268 = vmatmul.mubr.bf16.gmra.mrb[0].mxu0 %v1209
      %v1269 = vpop.f32.mrb[0].mxu0
      %v1270 = vadd.f32 0.0, %v1269
      %v1271 = vpop.f32.mrb[0].mxu0
      %v1272 = vpop.f32.mrb[0].mxu0
      %v1273 = vadd.f32 0.0, %v1272
      %v1274 = vpop.f32.mrb[0].mxu0
      %1275 = vdwg.mxu0
      %v1276 = vmax.f32 %v1162, %v1246
      %v1277 = vmax.f32 %v1163, %v1249
      %v1278 = vmax.f32 %v1164, %v1254
      %v1279 = vmax.f32 %v1165, %v1257
      %v1280 = vmax.f32 %v1166, %v1262
      %v1281 = vmax.f32 %v1167, %v1265
      %v1282 = vmax.f32 %v1168, %v1270
      %v1283 = vmax.f32 %v1169, %v1273
      %v1284 = vld [vmem:[%s2] sm:$0x1]
      %v1286 = vlaneseq
      %v1287 = vshrl.u32 %v1286, 7
      %v1288 = vsub.s32 0, %v1287
      %v1289 = vrot.slane %v1284, %v1288
      %v1291 = vadd.f32 %v1276, %v1289
      %v1292 = vadd.f32 %v1277, %v1289
      %v1293 = vadd.f32 %v1278, %v1289
      %v1294 = vadd.f32 %v1279, %v1289
      %v1295 = vadd.f32 %v1280, %v1289
      %v1296 = vadd.f32 %v1281, %v1289
      %v1297 = vadd.f32 %v1282, %v1289
      %v1298 = vadd.f32 %v1283, %v1289
      %vm1299 = vcmp.gt.f32.partialorder %v1291, 0.0
      %vm1300 = vcmp.gt.f32.partialorder %v1292, 0.0
      %vm1301 = vcmp.gt.f32.partialorder %v1293, 0.0
      %vm1302 = vcmp.gt.f32.partialorder %v1294, 0.0
      %vm1303 = vcmp.gt.f32.partialorder %v1295, 0.0
      %vm1304 = vcmp.gt.f32.partialorder %v1296, 0.0
      %vm1305 = vcmp.gt.f32.partialorder %v1297, 0.0
      %vm1306 = vcmp.gt.f32.partialorder %v1298, 0.0
      %v1307 = vmul.f32 %v1291, 0.1
      %v1308 = vmul.f32 %v1292, 0.1
      %v1309 = vmul.f32 %v1293, 0.1
      %v1310 = vmul.f32 %v1294, 0.1
      %v1311 = vmul.f32 %v1295, 0.1
      %v1312 = vmul.f32 %v1296, 0.1
      %v1313 = vmul.f32 %v1297, 0.1
      %v1314 = vmul.f32 %v1298, 0.1
      %v1315 = vsel %vm1299, %v1291, %v1307
      %v1316 = vsel %vm1300, %v1292, %v1308
      %v1317 = vsel %vm1301, %v1293, %v1309
      %v1318 = vsel %vm1302, %v1294, %v1310
      %v1319 = vsel %vm1303, %v1295, %v1311
      %v1320 = vsel %vm1304, %v1296, %v1312
      %v1321 = vsel %vm1305, %v1297, %v1313
      %v1322 = vsel %vm1306, %v1298, %v1314
      %v1323 = vtanh.pop %v1315
      %v1324 = vtanh.pop %v1316
      %v1325 = vtanh.pop %v1317
      %v1326 = vtanh.pop %v1318
      %v1327 = vtanh.pop %v1319
      %v1328 = vtanh.pop %v1320
      %v1329 = vtanh.pop %v1321
      %v1330 = vtanh.pop %v1322
      %v1331 = vld [vmem:[%s314] sm:$0xff]
      %v1332 = vld [vmem:[%s314 + $0x8] sm:$0xff]
      %v1333 = vld [vmem:[%s314 + $0x10] sm:$0xff]
      %v1334 = vld [vmem:[%s314 + $0x18] sm:$0xff]
      %v1335 = vld [vmem:[%s314 + $0x20] sm:$0xff]
      %v1336 = vld [vmem:[%s314 + $0x28] sm:$0xff]
      %v1337 = vld [vmem:[%s314 + $0x30] sm:$0xff]
      %v1338 = vld [vmem:[%s314 + $0x38] sm:$0xff]
      %v1339 = vld [vmem:[%s324] sm:$0xff]
      %v1340 = vld [vmem:[%s324 + $0x8] sm:$0xff]
      %v1341 = vld [vmem:[%s324 + $0x10] sm:$0xff]
      %v1342 = vld [vmem:[%s324 + $0x18] sm:$0xff]
      %v1343 = vld [vmem:[%s324 + $0x20] sm:$0xff]
      %v1344 = vld [vmem:[%s324 + $0x28] sm:$0xff]
      %v1345 = vld [vmem:[%s324 + $0x30] sm:$0xff]
      %v1346 = vld [vmem:[%s324 + $0x38] sm:$0xff]
      %v1347 = vsub.f32 1.0, %v1331
      %v1348 = vsub.f32 1.0, %v1332
      %v1349 = vsub.f32 1.0, %v1333
      %v1350 = vsub.f32 1.0, %v1334
      %v1351 = vsub.f32 1.0, %v1335
      %v1352 = vsub.f32 1.0, %v1336
      %v1353 = vsub.f32 1.0, %v1337
      %v1354 = vsub.f32 1.0, %v1338
      %v1355 = vmul.f32 %v1347, %v1339
      %v1356 = vmul.f32 %v1348, %v1340
      %v1357 = vmul.f32 %v1349, %v1341
      %v1358 = vmul.f32 %v1350, %v1342
      %v1359 = vmul.f32 %v1351, %v1343
      %v1360 = vmul.f32 %v1352, %v1344
      %v1361 = vmul.f32 %v1353, %v1345
      %v1362 = vmul.f32 %v1354, %v1346
      %v1363 = vmul.f32 %v1331, %v1323
      %v1364 = vmul.f32 %v1332, %v1324
      %v1365 = vmul.f32 %v1333, %v1325
      %v1366 = vmul.f32 %v1334, %v1326
      %v1367 = vmul.f32 %v1335, %v1327
      %v1368 = vmul.f32 %v1336, %v1328
      %v1369 = vmul.f32 %v1337, %v1329
      %v1370 = vmul.f32 %v1338, %v1330
      %v1371 = vadd.f32 %v1355, %v1363
      %v1372 = vadd.f32 %v1356, %v1364
      %v1373 = vadd.f32 %v1357, %v1365
      %v1374 = vadd.f32 %v1358, %v1366
      %v1375 = vadd.f32 %v1359, %v1367
      %v1376 = vadd.f32 %v1360, %v1368
      %v1377 = vadd.f32 %v1361, %v1369
      %v1378 = vadd.f32 %v1362, %v1370
      %vm1379 = vcmask 261120
      %1380 = vst.msk [vmem:[%s334] sm:$0xff] %vm1379, %v1371
      %1381 = vst.msk [vmem:[%s334 + $0x8] sm:$0xff] %vm1379, %v1372
      %1382 = vst.msk [vmem:[%s334 + $0x10] sm:$0xff] %vm1379, %v1373
      %1383 = vst.msk [vmem:[%s334 + $0x18] sm:$0xff] %vm1379, %v1374
      %1384 = vst.msk [vmem:[%s334 + $0x20] sm:$0xff] %vm1379, %v1375
      %1385 = vst.msk [vmem:[%s334 + $0x28] sm:$0xff] %vm1379, %v1376
      %1386 = vst.msk [vmem:[%s334 + $0x30] sm:$0xff] %vm1379, %v1377
      %1387 = vst.msk [vmem:[%s334 + $0x38] sm:$0xff] %vm1379, %v1378
      %s1388 = smul.u32 8, %s21
      %p1389 = scmp.lt.s32.totalorder %s20, 1
      %s1390 = scalar_select %p1389, %s20, 1
      %p1391 = scmp.lt.s32.totalorder %s1388, 7
      %s1392 = scalar_select %p1391, %s1388, 7
      %s1393 = smul.addr %s1390, 8
      %s1394 = sadd.s32 %s1392, %s1393
      %s1395 = smul.addr %s1394, 8
      %s1396 = scalar_lea.vmem %s5, %s1395
      // Predicated region
      $region41: #{gru_forward.3} parent=39 // pred_check
        %p1397 = pneg %p174
      $region42: #{gru_forward.3} parent=39 // pred_check_branch
        %1399 = sbr.rel (%p1397) target = $region44
      $region43: #{gru_forward.3} parent=39 // pred_region
        %s1400 = smul.u32 8, %s21
      $region44: #{gru_forward.3} parent=39 // pred_fallthru
        _
    $region40: #{gru_forward.3} parent=5 // pred_fallthru
      _
    %p1401 = scmp.le.s32.totalorder 2, %s11
    // Predicated region
    $region45: #{gru_forward.3} parent=5 // pred_check
      %p1402 = pneg %p1401
    $region46: #{gru_forward.3} parent=5 // pred_check_branch
      %1404 = sbr.rel (%p1402) target = $region48
    $region47: #{gru_forward.3} parent=5 // pred_region
      %s1405 = ssub.s32 %s11, 2
      // Predicated region
      $region49: #{gru_forward.3} parent=47 // pred_check
        %p1406 = pneg %p180
      $region50: #{gru_forward.3} parent=47 // pred_check_branch
        %1408 = sbr.rel (%p1406) target = $region52
      $region51: #{gru_forward.3} parent=47 // pred_region
        %s1409 = smul.u32 8, %s23
        %p1410 = scmp.lt.s32.totalorder %s22, 1
        %s1411 = scalar_select %p1410, %s22, 1
        %p1412 = scmp.lt.s32.totalorder %s1409, 7
        %s1413 = scalar_select %p1412, %s1409, 7
        %s1414 = smul.addr %s1411, 8
        %s1415 = sadd.s32 %s1413, %s1414
        %s1416 = smul.addr %s1415, 8
        %s1417 = scalar_lea.vmem %s5, %s1416
      $region52: #{gru_forward.3} parent=47 // pred_fallthru
        _
    $region48: #{gru_forward.3} parent=5 // pred_fallthru
      _
  $region6: #{gru_forward.3} parent=0 // loop_footer
    %s15 = sadd.s32 1, %s11
  $region7: #{gru_forward.3} parent=0 // loop_footer_branch
    %10 = sbr.rel target = $region3
  $region8: #{gru_forward.3} parent=0 // loop_exit
    _

// kernel: gru_forward.2
$region0: #{gru_forward.2}
  #allocation0 [shape = 'u32[]', space=smem, size = 0x4, offset = 0x4, fixed_abs, tag = 'smem constant byte address 0x4 - core index']
  #allocation1 [shape = 'u32[144,128]{1,0:T(1,128)}', space=vmem, size = 0x12000, scoped, tag = 'internal scratch']
  %s0 = inlined_call_operand.vmem [shape: bf16[2,8,64,67], index: 0, kind: input, shape index: {}]
  %s1 = inlined_call_operand.vmem [shape: bf16[67,64], index: 1, kind: input, shape index: {}]
  %s2 = inlined_call_operand.vmem [shape: f32[1,64], index: 2, kind: input, shape index: {}]
  %s3 = inlined_call_operand.vmem [shape: f32[2,64,32], index: 3, kind: input, shape index: {}]
  %s4 = inlined_call_operand.vmem [shape: f32[2,64,64], index: 4, kind: output, shape index: {}]
  %s5 = sld [smem:[#allocation0]]
  $region49: #{gru_forward.2} parent=0
    _
  %s7 = ssub.s32 1, %s5
  %s8 = scalar_select 0, %s7, %s5
  loop: start=0, step=1, limit=4
  $region2: #{gru_forward.2} parent=0 // loop_pre_header
    _
  $region3: #{gru_forward.2} parent=0 // loop_header
    %s10 = sphi 0, %s14
    %p11 = scmp.ge.s32.totalorder %s10, 4
    %s17 = sphi 0, %s29
    %s18 = sphi 0, %s25
    %s19 = sphi 0, %s17
    %s20 = sphi 0, %s18
    %s21 = sphi 0, %s19
    %s22 = sphi 0, %s20
    %s34 = sphi 0, %s36
    %s37 = sphi 0, %s34
    %s38 = sphi 0, %s37
    %s54 = sphi 0, %s38
    %s58 = sphi 0, %s58
    %s60 = sphi 0, %s58
    %s61 = sphi 0, %s60
    %s75 = sphi 0, %s61
    %s79 = sphi 0, %s79
    %s81 = sphi 0, %s79
    %s82 = sphi 0, %s81
    %s96 = sphi 0, %s82
    %s104 = sphi 0, %s106
    %s107 = sphi 0, %s104
    %s108 = sphi 0, %s107
    %s124 = sphi 0, %s108
    %s132 = sphi 0, %s134
    %s135 = sphi 0, %s132
    %s136 = sphi 0, %s135
    %s152 = sphi 0, %s136
  $region4: #{gru_forward.2} parent=0 // loop_header_branch
    %13 = sbr.rel (%p11) target = $region8
  $region5: #{gru_forward.2} parent=0 // loop_body
    %s15 = ssub.s32 %s10, 1
    %s16 = ssub.s32 %s10, 2
    %s23 = sadd.s32 1, %s18
    %p24 = scmp.ge.s32.totalorder %s23, 1
    %s25 = scalar_select %p24, 0, %s23
    %s26 = sadd.s32 1, %s17
    %s27 = scalar_select %p24, %s26, %s17
    %p28 = scmp.ge.s32.totalorder %s27, 2
    %s29 = scalar_select %p28, 0, %s27
    %s30 = ssub.s32 %s17, %s29
    %s31 = ssub.s32 %s18, %s25
    %s32 = sor.u32 %s30, %s31
    %p33 = scmp.eq.s32.totalorder %s32, 0
    %s35 = sadd.s32 %s34, 1
    %s36 = scalar_select %p33, %s34, %s35
    %p39 = pneg %p33
    %p40 = scmp.eq.s32.totalorder %s10, 1
    %p41 = por %p39, %p40
    %p42 = scmp.ne.s32.totalorder %s34, %s37
    %p43 = scmp.eq.s32.totalorder %s10, 0
    %p44 = por %p42, %p43
    %p45 = scmp.ne.s32.totalorder %s34, %s37
    %p46 = scmp.eq.s32.totalorder %s15, 1
    %p47 = por %p45, %p46
    %p48 = scmp.ne.s32.totalorder %s37, %s38
    %p49 = scmp.eq.s32.totalorder %s15, 0
    %p50 = por %p48, %p49
    %p51 = scmp.ne.s32.totalorder %s37, %s38
    %p52 = scmp.eq.s32.totalorder %s16, 1
    %p53 = por %p51, %p52
    %p55 = scmp.ne.s32.totalorder %s38, %s54
    %p56 = scmp.eq.s32.totalorder %s16, 0
    %p57 = por %p55, %p56
    %s59 = sadd.s32 %s58, 1
    %p62 = scmp.eq.s32.totalorder %s10, 1
    %p63 = scmp.ne.s32.totalorder %s58, %s60
    %p64 = scmp.eq.s32.totalorder %s10, 0
    %p65 = por %p63, %p64
    %p66 = scmp.ne.s32.totalorder %s58, %s60
    %p67 = scmp.eq.s32.totalorder %s15, 1
    %p68 = por %p66, %p67
    %p69 = scmp.ne.s32.totalorder %s60, %s61
    %p70 = scmp.eq.s32.totalorder %s15, 0
    %p71 = por %p69, %p70
    %p72 = scmp.ne.s32.totalorder %s60, %s61
    %p73 = scmp.eq.s32.totalorder %s16, 1
    %p74 = por %p72, %p73
    %p76 = scmp.ne.s32.totalorder %s61, %s75
    %p77 = scmp.eq.s32.totalorder %s16, 0
    %p78 = por %p76, %p77
    %s80 = sadd.s32 %s79, 1
    %p83 = scmp.eq.s32.totalorder %s10, 1
    %p84 = scmp.ne.s32.totalorder %s79, %s81
    %p85 = scmp.eq.s32.totalorder %s10, 0
    %p86 = por %p84, %p85
    %p87 = scmp.ne.s32.totalorder %s79, %s81
    %p88 = scmp.eq.s32.totalorder %s15, 1
    %p89 = por %p87, %p88
    %p90 = scmp.ne.s32.totalorder %s81, %s82
    %p91 = scmp.eq.s32.totalorder %s15, 0
    %p92 = por %p90, %p91
    %p93 = scmp.ne.s32.totalorder %s81, %s82
    %p94 = scmp.eq.s32.totalorder %s16, 1
    %p95 = por %p93, %p94
    %p97 = scmp.ne.s32.totalorder %s82, %s96
    %p98 = scmp.eq.s32.totalorder %s16, 0
    %p99 = por %p97, %p98
    %s100 = ssub.s32 %s17, %s29
    %s101 = ssub.s32 %s18, %s25
    %s102 = sor.u32 %s100, %s101
    %p103 = scmp.eq.s32.totalorder %s102, 0
    %s105 = sadd.s32 %s104, 1
    %s106 = scalar_select %p103, %s104, %s105
    %p109 = pneg %p103
    %p110 = scmp.eq.s32.totalorder %s10, 1
    %p111 = por %p109, %p110
    %p112 = scmp.ne.s32.totalorder %s104, %s107
    %p113 = scmp.eq.s32.totalorder %s10, 0
    %p114 = por %p112, %p113
    %p115 = scmp.ne.s32.totalorder %s104, %s107
    %p116 = scmp.eq.s32.totalorder %s15, 1
    %p117 = por %p115, %p116
    %p118 = scmp.ne.s32.totalorder %s107, %s108
    %p119 = scmp.eq.s32.totalorder %s15, 0
    %p120 = por %p118, %p119
    %p121 = scmp.ne.s32.totalorder %s107, %s108
    %p122 = scmp.eq.s32.totalorder %s16, 1
    %p123 = por %p121, %p122
    %p125 = scmp.ne.s32.totalorder %s108, %s124
    %p126 = scmp.eq.s32.totalorder %s16, 0
    %p127 = por %p125, %p126
    %s128 = ssub.s32 %s17, %s29
    %s129 = ssub.s32 %s18, %s25
    %s130 = sor.u32 %s128, %s129
    %p131 = scmp.eq.s32.totalorder %s130, 0
    %s133 = sadd.s32 %s132, 1
    %s134 = scalar_select %p131, %s132, %s133
    %p137 = pneg %p131
    %p138 = scmp.eq.s32.totalorder %s10, 1
    %p139 = por %p137, %p138
    %p140 = scmp.ne.s32.totalorder %s132, %s135
    %p141 = scmp.eq.s32.totalorder %s10, 0
    %p142 = por %p140, %p141
    %p143 = scmp.ne.s32.totalorder %s132, %s135
    %p144 = scmp.eq.s32.totalorder %s15, 1
    %p145 = por %p143, %p144
    %p146 = scmp.ne.s32.totalorder %s135, %s136
    %p147 = scmp.eq.s32.totalorder %s15, 0
    %p148 = por %p146, %p147
    %p149 = scmp.ne.s32.totalorder %s135, %s136
    %p150 = scmp.eq.s32.totalorder %s16, 1
    %p151 = por %p149, %p150
    %p153 = scmp.ne.s32.totalorder %s136, %s152
    %p154 = scmp.eq.s32.totalorder %s16, 0
    %p155 = por %p153, %p154
    %p156 = scmp.le.s32.totalorder 1, %s10
    %p157 = scmp.lt.s32.totalorder %s10, 3
    %p158 = pnand %p156, %p157
    %p159 = pneg %p158
    // Predicated region
    $region9: #{gru_forward.2} parent=5 // pred_check
      _
    $region10: #{gru_forward.2} parent=5 // pred_check_branch
      %161 = sbr.rel (%p158) target = $region12
    $region11: #{gru_forward.2} parent=5 // pred_region
      %s162 = ssub.s32 %s10, 1
      // Predicated region
      $region13: #{gru_forward.2} parent=11 // pred_check
        %p163 = pneg %p71
      $region14: #{gru_forward.2} parent=11 // pred_check_branch
        %165 = sbr.rel (%p163) target = $region16
      $region15: #{gru_forward.2} parent=11 // pred_region
        _
      $region16: #{gru_forward.2} parent=11 // pred_fallthru
        _
      // Predicated region
      $region17: #{gru_forward.2} parent=11 // pred_check
        %p166 = pneg %p92
      $region18: #{gru_forward.2} parent=11 // pred_check_branch
        %168 = sbr.rel (%p166) target = $region20
      $region19: #{gru_forward.2} parent=11 // pred_region
        _
      $region20: #{gru_forward.2} parent=11 // pred_fallthru
        _
    $region12: #{gru_forward.2} parent=5 // pred_fallthru
      _
    %p169 = scmp.lt.s32.totalorder %s10, 2
    // Predicated region
    $region21: #{gru_forward.2} parent=5 // pred_check
      %p170 = pneg %p169
    $region22: #{gru_forward.2} parent=5 // pred_check_branch
      %172 = sbr.rel (%p170) target = $region24
    $region23: #{gru_forward.2} parent=5 // pred_region
      // Predicated region
      $region25: #{gru_forward.2} parent=23 // pred_check
        %p173 = pneg %p44
      $region26: #{gru_forward.2} parent=23 // pred_check_branch
        %175 = sbr.rel (%p173) target = $region28
      $region27: #{gru_forward.2} parent=23 // pred_region
        %s176 = smul.u32 8, %s18
        %p177 = scmp.lt.s32.totalorder %s17, 1
        %s178 = scalar_select %p177, %s17, 1
        %p179 = scmp.lt.s32.totalorder %s176, 7
        %s180 = scalar_select %p179, %s176, 7
        %s181 = smul.addr %s178, 64
        %s182 = sadd.s32 %s180, %s181
        %s183 = smul.addr %s182, 4
        %s184 = scalar_lea.vmem %s0, %s183
        %s185 = smul.u32 8, %s18
      $region28: #{gru_forward.2} parent=23 // pred_fallthru
        _
      // Predicated region
      $region29: #{gru_forward.2} parent=23 // pred_check
        %p186 = pneg %p114
      $region30: #{gru_forward.2} parent=23 // pred_check_branch
        %188 = sbr.rel (%p186) target = $region32
      $region31: #{gru_forward.2} parent=23 // pred_region
        %s189 = smul.u32 8, %s18
        %p190 = scmp.lt.s32.totalorder %s17, 1
        %s191 = scalar_select %p190, %s17, 1
        %p192 = scmp.lt.s32.totalorder %s189, 7
        %s193 = scalar_select %p192, %s189, 7
        %s194 = smul.addr %s191, 8
        %s195 = sadd.s32 %s193, %s194
        %s196 = smul.addr %s195, 8
        %s197 = scalar_lea.vmem %s3, %s196
        %s198 = smul.u32 8, %s18
      $region32: #{gru_forward.2} parent=23 // pred_fallthru
        _
    $region24: #{gru_forward.2} parent=5 // pred_fallthru
      _
    %p199 = scmp.le.s32.totalorder 1, %s10
    %p200 = scmp.lt.s32.totalorder %s10, 3
    %p201 = pnand %p199, %p200
    %p202 = pneg %p201
    // Predicated region
    $region33: #{gru_forward.2} parent=5 // pred_check
      _
    $region34: #{gru_forward.2} parent=5 // pred_check_branch
      %204 = sbr.rel (%p201) target = $region36
    $region35: #{gru_forward.2} parent=5 // pred_region
      %s205 = ssub.s32 %s10, 1
      %s206 = smul.u32 8, %s20
      %p207 = scmp.lt.s32.totalorder %s19, 1
      %s208 = scalar_select %p207, %s19, 1
      %p209 = scmp.lt.s32.totalorder %s206, 7
      %s210 = scalar_select %p209, %s206, 7
      %s211 = smul.addr %s208, 64
      %s212 = sadd.s32 %s210, %s211
      %s213 = smul.addr %s212, 4
      %s214 = scalar_lea.vmem %s0, %s213
      %p215 = pneg %p50
      %p216 = pneg %p47
      %p217 = pneg %p71
      %p218 = pneg %p68
      %p219 = pneg %p92
      %p220 = pneg %p89
      %s221 = smul.u32 8, %s20
      %p222 = scmp.lt.s32.totalorder %s19, 1
      %s223 = scalar_select %p222, %s19, 1
      %p224 = scmp.lt.s32.totalorder %s221, 7
      %s225 = scalar_select %p224, %s221, 7
      %s226 = smul.addr %s223, 8
      %s227 = sadd.s32 %s225, %s226
      %s228 = smul.addr %s227, 8
      %s229 = scalar_lea.vmem %s3, %s228
      %p230 = pneg %p120
      %p231 = pneg %p117
      %p232 = pneg %p148
      %p233 = pneg %p145
      %s234 = smul.u32 8, %s20
      %p235 = scmp.lt.s32.totalorder %s19, 1
      %s236 = scalar_select %p235, %s19, 1
      %p237 = scmp.lt.s32.totalorder %s234, 7
      %s238 = scalar_select %p237, %s234, 7
      %s239 = smul.addr %s236, 8
      %s240 = sadd.s32 %s238, %s239
      %s241 = smul.addr %s240, 8
      %s242 = scalar_lea.vmem %s4, %s241
      %s243 = smul.u32 8, %s20
      %p244 = scmp.lt.s32.totalorder %s19, 1
      %s245 = scalar_select %p244, %s19, 1
      %p246 = scmp.lt.s32.totalorder %s243, 7
      %s247 = scalar_select %p246, %s243, 7
      %s248 = smul.addr %s245, 64
      %s249 = sadd.s32 %s247, %s248
      %s250 = smul.addr %s249, 4
      %s251 = scalar_lea.vmem %s0, %s250
      %s252 = smul.u32 8, %s20
      %s253 = smul.u32 8, %s20
      %p254 = scmp.lt.s32.totalorder %s19, 1
      %s255 = scalar_select %p254, %s19, 1
      %p256 = scmp.lt.s32.totalorder %s253, 7
      %s257 = scalar_select %p256, %s253, 7
      %s258 = smul.addr %s255, 8
      %s259 = sadd.s32 %s257, %s258
      %s260 = smul.addr %s259, 8
      %s261 = scalar_lea.vmem %s3, %s260
      %s262 = smul.u32 8, %s20
      %s263 = smul.u32 8, %s20
      %p264 = scmp.lt.s32.totalorder %s19, 1
      %s265 = scalar_select %p264, %s19, 1
      %p266 = scmp.lt.s32.totalorder %s263, 7
      %s267 = scalar_select %p266, %s263, 7
      %s268 = smul.addr %s265, 8
      %s269 = sadd.s32 %s267, %s268
      %s270 = smul.addr %s269, 8
      %s271 = scalar_lea.vmem %s4, %s270
      %s272 = smul.u32 8, %s20
      %v274 = vld [vmem:[%s251] sm:$0xf]
      %v275 = vld [vmem:[%s251 + $0x4] sm:$0xf]
      %v276 = vld [vmem:[%s251 + $0x8] sm:$0xf]
      %v277 = vld [vmem:[%s251 + $0xc] sm:$0xf]
      %v278 = vld [vmem:[%s251 + $0x10] sm:$0xf]
      %v279 = vld [vmem:[%s251 + $0x14] sm:$0xf]
      %v280 = vld [vmem:[%s251 + $0x18] sm:$0xf]
      %v281 = vld [vmem:[%s251 + $0x1c] sm:$0xf]
      %v282 = vld [vmem:[%s1] sm:$0xf]
      %v283 = vld [vmem:[%s1 + $0x4] sm:$0xf]
      %v284 = vld [vmem:[%s1 + $0x8] sm:$0xf]
      %v285 = vld [vmem:[%s1 + $0xc] sm:$0xf]
      %v286 = vld [vmem:[%s1 + $0x10] sm:$0xf]
      %v287 = vld [vmem:[%s1 + $0x14] sm:$0xf]
      %v288 = vld [vmem:[%s1 + $0x18] sm:$0xf]
      %v289 = vld [vmem:[%s1 + $0x1c] sm:$0xf]
      %v290 = vld [vmem:[%s1 + $0x20] sm:$0x3]
      %v299 = vunpack.c.l.b16 %v274
      %v300 = vunpack.c.l.b16 %v275
      %v301 = vunpack.c.l.b16 %v276
      %v302 = vunpack.c.l.b16 %v277
      %v303 = vunpack.c.l.b16 %v278
      %v304 = vunpack.c.l.b16 %v279
      %v305 = vunpack.c.l.b16 %v280
      %v306 = vunpack.c.l.b16 %v281
      %v307 = vpack.c.b16 %v300, %v299
      %v308 = vpack.c.b16 %v302, %v301
      %v309 = vpack.c.b16 %v304, %v303
      %v310 = vpack.c.b16 %v306, %v305
      %v320 = vunpack.c.l.b16 %v282
      %v321 = vunpack.c.l.b16 %v283
      %v322 = vunpack.c.l.b16 %v284
      %v323 = vunpack.c.l.b16 %v285
      %v324 = vunpack.c.l.b16 %v286
      %v325 = vunpack.c.l.b16 %v287
      %v326 = vunpack.c.l.b16 %v288
      %v327 = vunpack.c.l.b16 %v289
      %v328 = vunpack.c.l.b16 %v290
      %v329 = vpack.c.b16 %v321, %v320
      %v330 = vpack.c.b16 %v323, %v322
      %v331 = vpack.c.b16 %v325, %v324
      %v332 = vpack.c.b16 %v327, %v326
      %v333 = vpack.c.b16 %v328, %v328
      %vm338 = vcmask 547840
      %v340 = vsel %vm338, %v307, 0
      %v343 = vsel %vm338, %v308, 0
      %v346 = vsel %vm338, %v309, 0
      %v349 = vsel %vm338, %v310, 0
      %vm351 = vcmask 1040384
      %vm352 = vcmask 1041408
      %v353 = vsel %vm351, 4294967295, 65535
      %v354 = vsel %vm352, %v353, 0
      %v356 = vand.u32 %v333, %v354
      %358 = vmatprep.subr.bf16.mxu0 0
      %359 = vmatpush1.bf16.msra.mxu0 %v329
      %360 = vmatprep.subr.bf16.mxu0 0
      %361 = vmatpush1.bf16.msra.mxu0 %v330
      %362 = vmatprep.subr.bf16.mxu0 0
      %363 = vmatpush1.bf16.msra.mxu0 %v331
      %364 = vmatprep.subr.bf16.mxu0 0
      %365 = vmatpush1.bf16.msra.mxu0 %v332
      %366 = vmatprep.subr.bf16.mxu0 0
      %367 = vmatpush1.bf16.msra.mxu0 %v356
      %368 = vmatprep.subr.bf16.mxu0 0
      %369 = vmatpush1.bf16.msra.mxu0 0
      %370 = vmatprep.subr.bf16.mxu0 0
      %371 = vmatpush1.bf16.msra.mxu0 0
      %372 = vmatprep.subr.bf16.mxu0 0
      %373 = vmatpush1.bf16.msra.mxu0 0
      %374 = vmatprep.subr.bf16.mxu0 0
      %375 = vmatpush1.bf16.msra.mxu0 0
      %376 = vmatprep.subr.bf16.mxu0 0
      %377 = vmatpush1.bf16.msra.mxu0 0
      %378 = vmatprep.subr.bf16.mxu0 0
      %379 = vmatpush1.bf16.msra.mxu0 0
      %380 = vmatprep.subr.bf16.mxu0 0
      %381 = vmatpush1.bf16.msra.mxu0 0
      %382 = vmatprep.subr.bf16.mxu0 0
      %383 = vmatpush1.bf16.msra.mxu0 0
      %384 = vmatprep.subr.bf16.mxu0 0
      %385 = vmatpush1.bf16.msra.mxu0 0
      %386 = vmatprep.subr.bf16.mxu0 0
      %387 = vmatpush1.bf16.msra.mxu0 0
      %388 = vmatprep.subr.bf16.mxu0 0
      %389 = vmatpush1.bf16.msra.mxu0 0
      %390 = vmatprep.mubr.bf16.mxu0 0
      %391 = vmatmul.mubr.bf16.gmra.mrb[0].mxu0 %v340
      %v392 = vpop.f32.mrb[0].mxu0
      %v393 = vadd.f32 0.0, %v392
      %v394 = vpop.f32.mrb[0].mxu0
      %v395 = vpop.f32.mrb[0].mxu0
      %v396 = vadd.f32 0.0, %v395
      %v397 = vpop.f32.mrb[0].mxu0
      %398 = vmatprep.mubr.bf16.mxu0 0
      %399 = vmatmul.mubr.bf16.gmra.mrb[0].mxu0 %v343
      %v400 = vpop.f32.mrb[0].mxu0
      %v401 = vadd.f32 0.0, %v400
      %v402 = vpop.f32.mrb[0].mxu0
      %v403 = vpop.f32.mrb[0].mxu0
      %v404 = vadd.f32 0.0, %v403
      %v405 = vpop.f32.mrb[0].mxu0
      %406 = vmatprep.mubr.bf16.mxu0 0
      %407 = vmatmul.mubr.bf16.gmra.mrb[0].mxu0 %v346
      %v408 = vpop.f32.mrb[0].mxu0
      %v409 = vadd.f32 0.0, %v408
      %v410 = vpop.f32.mrb[0].mxu0
      %v411 = vpop.f32.mrb[0].mxu0
      %v412 = vadd.f32 0.0, %v411
      %v413 = vpop.f32.mrb[0].mxu0
      %414 = vmatprep.mubr.bf16.mxu0 0
      %415 = vmatmul.mubr.bf16.gmra.mrb[0].mxu0 %v349
      %v416 = vpop.f32.mrb[0].mxu0
      %v417 = vadd.f32 0.0, %v416
      %v418 = vpop.f32.mrb[0].mxu0
      %v419 = vpop.f32.mrb[0].mxu0
      %v420 = vadd.f32 0.0, %v419
      %v421 = vpop.f32.mrb[0].mxu0
      %422 = vdwg.mxu0
      %s423 = scalar_lea.vmem %s251, 32
      %v424 = vld [vmem:[%s423] sm:$0xf]
      %v425 = vld [vmem:[%s423 + $0x4] sm:$0xf]
      %v426 = vld [vmem:[%s423 + $0x8] sm:$0xf]
      %v427 = vld [vmem:[%s423 + $0xc] sm:$0xf]
      %v428 = vld [vmem:[%s423 + $0x10] sm:$0xf]
      %v429 = vld [vmem:[%s423 + $0x14] sm:$0xf]
      %v430 = vld [vmem:[%s423 + $0x18] sm:$0xf]
      %v431 = vld [vmem:[%s423 + $0x1c] sm:$0xf]
      %v440 = vunpack.c.l.b16 %v424
      %v441 = vunpack.c.l.b16 %v425
      %v442 = vunpack.c.l.b16 %v426
      %v443 = vunpack.c.l.b16 %v427
      %v444 = vunpack.c.l.b16 %v428
      %v445 = vunpack.c.l.b16 %v429
      %v446 = vunpack.c.l.b16 %v430
      %v447 = vunpack.c.l.b16 %v431
      %v448 = vpack.c.b16 %v441, %v440
      %v449 = vpack.c.b16 %v443, %v442
      %v450 = vpack.c.b16 %v445, %v444
      %v451 = vpack.c.b16 %v447, %v446
      %v453 = vsel %vm338, %v448, 0
      %v456 = vsel %vm338, %v449, 0
      %v459 = vsel %vm338, %v450, 0
      %v462 = vsel %vm338, %v451, 0
      %464 = vmatprep.subr.bf16.mxu0 0
      %465 = vmatpush1.bf16.msra.mxu0 %v329
      %466 = vmatprep.subr.bf16.mxu0 0
      %467 = vmatpush1.bf16.msra.mxu0 %v330
      %468 = vmatprep.subr.bf16.mxu0 0
      %469 = vmatpush1.bf16.msra.mxu0 %v331
      %470 = vmatprep.subr.bf16.mxu0 0
      %471 = vmatpush1.bf16.msra.mxu0 %v332
      %472 = vmatprep.subr.bf16.mxu0 0
      %473 = vmatpush1.bf16.msra.mxu0 %v356
      %474 = vmatprep.subr.bf16.mxu0 0
      %475 = vmatpush1.bf16.msra.mxu0 0
      %476 = vmatprep.subr.bf16.mxu0 0
      %477 = vmatpush1.bf16.msra.mxu0 0
      %478 = vmatprep.subr.bf16.mxu0 0
      %479 = vmatpush1.bf16.msra.mxu0 0
      %480 = vmatprep.subr.bf16.mxu0 0
      %481 = vmatpush1.bf16.msra.mxu0 0
      %482 = vmatprep.subr.bf16.mxu0 0
      %483 = vmatpush1.bf16.msra.mxu0 0
      %484 = vmatprep.subr.bf16.mxu0 0
      %485 = vmatpush1.bf16.msra.mxu0 0
      %486 = vmatprep.subr.bf16.mxu0 0
      %487 = vmatpush1.bf16.msra.mxu0 0
      %488 = vmatprep.subr.bf16.mxu0 0
      %489 = vmatpush1.bf16.msra.mxu0 0
      %490 = vmatprep.subr.bf16.mxu0 0
      %491 = vmatpush1.bf16.msra.mxu0 0
      %492 = vmatprep.subr.bf16.mxu0 0
      %493 = vmatpush1.bf16.msra.mxu0 0
      %494 = vmatprep.subr.bf16.mxu0 0
      %495 = vmatpush1.bf16.msra.mxu0 0
      %496 = vmatprep.mubr.bf16.mxu0 0
      %497 = vmatmul.mubr.bf16.gmra.mrb[0].mxu0 %v453
      %v498 = vpop.f32.mrb[0].mxu0
      %v499 = vadd.f32 0.0, %v498
      %v500 = vpop.f32.mrb[0].mxu0
      %v501 = vpop.f32.mrb[0].mxu0
      %v502 = vadd.f32 0.0, %v501
      %v503 = vpop.f32.mrb[0].mxu0
      %504 = vmatprep.mubr.bf16.mxu0 0
      %505 = vmatmul.mubr.bf16.gmra.mrb[0].mxu0 %v456
      %v506 = vpop.f32.mrb[0].mxu0
      %v507 = vadd.f32 0.0, %v506
      %v508 = vpop.f32.mrb[0].mxu0
      %v509 = vpop.f32.mrb[0].mxu0
      %v510 = vadd.f32 0.0, %v509
      %v511 = vpop.f32.mrb[0].mxu0
      %512 = vmatprep.mubr.bf16.mxu0 0
      %513 = vmatmul.mubr.bf16.gmra.mrb[0].mxu0 %v459
      %v514 = vpop.f32.mrb[0].mxu0
      %v515 = vadd.f32 0.0, %v514
      %v516 = vpop.f32.mrb[0].mxu0
      %v517 = vpop.f32.mrb[0].mxu0
      %v518 = vadd.f32 0.0, %v517
      %v519 = vpop.f32.mrb[0].mxu0
      %520 = vmatprep.mubr.bf16.mxu0 0
      %521 = vmatmul.mubr.bf16.gmra.mrb[0].mxu0 %v462
      %v522 = vpop.f32.mrb[0].mxu0
      %v523 = vadd.f32 0.0, %v522
      %v524 = vpop.f32.mrb[0].mxu0
      %v525 = vpop.f32.mrb[0].mxu0
      %v526 = vadd.f32 0.0, %v525
      %v527 = vpop.f32.mrb[0].mxu0
      %528 = vdwg.mxu0
      %v529 = vmax.f32 %v393, %v499
      %v530 = vmax.f32 %v396, %v502
      %v531 = vmax.f32 %v401, %v507
      %v532 = vmax.f32 %v404, %v510
      %v533 = vmax.f32 %v409, %v515
      %v534 = vmax.f32 %v412, %v518
      %v535 = vmax.f32 %v417, %v523
      %v536 = vmax.f32 %v420, %v526
      %s537 = scalar_lea.vmem %s251, 64
      %v538 = vld [vmem:[%s537] sm:$0xf]
      %v539 = vld [vmem:[%s537 + $0x4] sm:$0xf]
      %v540 = vld [vmem:[%s537 + $0x8] sm:$0xf]
      %v541 = vld [vmem:[%s537 + $0xc] sm:$0xf]
      %v542 = vld [vmem:[%s537 + $0x10] sm:$0xf]
      %v543 = vld [vmem:[%s537 + $0x14] sm:$0xf]
      %v544 = vld [vmem:[%s537 + $0x18] sm:$0xf]
      %v545 = vld [vmem:[%s537 + $0x1c] sm:$0xf]
      %v554 = vunpack.c.l.b16 %v538
      %v555 = vunpack.c.l.b16 %v539
      %v556 = vunpack.c.l.b16 %v540
      %v557 = vunpack.c.l.b16 %v541
      %v558 = vunpack.c.l.b16 %v542
      %v559 = vunpack.c.l.b16 %v543
      %v560 = vunpack.c.l.b16 %v544
      %v561 = vunpack.c.l.b16 %v545
      %v562 = vpack.c.b16 %v555, %v554
      %v563 = vpack.c.b16 %v557, %v556
      %v564 = vpack.c.b16 %v559, %v558
      %v565 = vpack.c.b16 %v561, %v560
      %v567 = vsel %vm338, %v562, 0
      %v570 = vsel %vm338, %v563, 0
      %v573 = vsel %vm338, %v564, 0
      %v576 = vsel %vm338, %v565, 0
      %578 = vmatprep.subr.bf16.mxu0 0
      %579 = vmatpush1.bf16.msra.mxu0 %v329
      %580 = vmatprep.subr.bf16.mxu0 0
      %581 = vmatpush1.bf16.msra.mxu0 %v330
      %582 = vmatprep.subr.bf16.mxu0 0
      %583 = vmatpush1.bf16.msra.mxu0 %v331
      %584 = vmatprep.subr.bf16.mxu0 0
      %585 = vmatpush1.bf16.msra.mxu0 %v332
      %586 = vmatprep.subr.bf16.mxu0 0
      %587 = vmatpush1.bf16.msra.mxu0 %v356
      %588 = vmatprep.subr.bf16.mxu0 0
      %589 = vmatpush1.bf16.msra.mxu0 0
      %590 = vmatprep.subr.bf16.mxu0 0
      %591 = vmatpush1.bf16.msra.mxu0 0
      %592 = vmatprep.subr.bf16.mxu0 0
      %593 = vmatpush1.bf16.msra.mxu0 0
      %594 = vmatprep.subr.bf16.mxu0 0
      %595 = vmatpush1.bf16.msra.mxu0 0
      %596 = vmatprep.subr.bf16.mxu0 0
      %597 = vmatpush1.bf16.msra.mxu0 0
      %598 = vmatprep.subr.bf16.mxu0 0
      %599 = vmatpush1.bf16.msra.mxu0 0
      %600 = vmatprep.subr.bf16.mxu0 0
      %601 = vmatpush1.bf16.msra.mxu0 0
      %602 = vmatprep.subr.bf16.mxu0 0
      %603 = vmatpush1.bf16.msra.mxu0 0
      %604 = vmatprep.subr.bf16.mxu0 0
      %605 = vmatpush1.bf16.msra.mxu0 0
      %606 = vmatprep.subr.bf16.mxu0 0
      %607 = vmatpush1.bf16.msra.mxu0 0
      %608 = vmatprep.subr.bf16.mxu0 0
      %609 = vmatpush1.bf16.msra.mxu0 0
      %610 = vmatprep.mubr.bf16.mxu0 0
      %611 = vmatmul.mubr.bf16.gmra.mrb[0].mxu0 %v567
      %v612 = vpop.f32.mrb[0].mxu0
      %v613 = vadd.f32 0.0, %v612
      %v614 = vpop.f32.mrb[0].mxu0
      %v615 = vpop.f32.mrb[0].mxu0
      %v616 = vadd.f32 0.0, %v615
      %v617 = vpop.f32.mrb[0].mxu0
      %618 = vmatprep.mubr.bf16.mxu0 0
      %619 = vmatmul.mubr.bf16.gmra.mrb[0].mxu0 %v570
      %v620 = vpop.f32.mrb[0].mxu0
      %v621 = vadd.f32 0.0, %v620
      %v622 = vpop.f32.mrb[0].mxu0
      %v623 = vpop.f32.mrb[0].mxu0
      %v624 = vadd.f32 0.0, %v623
      %v625 = vpop.f32.mrb[0].mxu0
      %626 = vmatprep.mubr.bf16.mxu0 0
      %627 = vmatmul.mubr.bf16.gmra.mrb[0].mxu0 %v573
      %v628 = vpop.f32.mrb[0].mxu0
      %v629 = vadd.f32 0.0, %v628
      %v630 = vpop.f32.mrb[0].mxu0
      %v631 = vpop.f32.mrb[0].mxu0
      %v632 = vadd.f32 0.0, %v631
      %v633 = vpop.f32.mrb[0].mxu0
      %634 = vmatprep.mubr.bf16.mxu0 0
      %635 = vmatmul.mubr.bf16.gmra.mrb[0].mxu0 %v576
      %v636 = vpop.f32.mrb[0].mxu0
      %v637 = vadd.f32 0.0, %v636
      %v638 = vpop.f32.mrb[0].mxu0
      %v639 = vpop.f32.mrb[0].mxu0
      %v640 = vadd.f32 0.0, %v639
      %v641 = vpop.f32.mrb[0].mxu0
      %642 = vdwg.mxu0
      %v643 = vmax.f32 %v529, %v613
      %v644 = vmax.f32 %v530, %v616
      %v645 = vmax.f32 %v531, %v621
      %v646 = vmax.f32 %v532, %v624
      %v647 = vmax.f32 %v533, %v629
      %v648 = vmax.f32 %v534, %v632
      %v649 = vmax.f32 %v535, %v637
      %v650 = vmax.f32 %v536, %v640
      %s651 = scalar_lea.vmem %s251, 96
      %v652 = vld [vmem:[%s651] sm:$0xf]
      %v653 = vld [vmem:[%s651 + $0x4] sm:$0xf]
      %v654 = vld [vmem:[%s651 + $0x8] sm:$0xf]
      %v655 = vld [vmem:[%s651 + $0xc] sm:$0xf]
      %v656 = vld [vmem:[%s651 + $0x10] sm:$0xf]
      %v657 = vld [vmem:[%s651 + $0x14] sm:$0xf]
      %v658 = vld [vmem:[%s651 + $0x18] sm:$0xf]
      %v659 = vld [vmem:[%s651 + $0x1c] sm:$0xf]
      %v668 = vunpack.c.l.b16 %v652
      %v669 = vunpack.c.l.b16 %v653
      %v670 = vunpack.c.l.b16 %v654
      %v671 = vunpack.c.l.b16 %v655
      %v672 = vunpack.c.l.b16 %v656
      %v673 = vunpack.c.l.b16 %v657
      %v674 = vunpack.c.l.b16 %v658
      %v675 = vunpack.c.l.b16 %v659
      %v676 = vpack.c.b16 %v669, %v668
      %v677 = vpack.c.b16 %v671, %v670
      %v678 = vpack.c.b16 %v673, %v672
      %v679 = vpack.c.b16 %v675, %v674
      %v681 = vsel %vm338, %v676, 0
      %v684 = vsel %vm338, %v677, 0
      %v687 = vsel %vm338, %v678, 0
      %v690 = vsel %vm338, %v679, 0
      %692 = vmatprep.subr.bf16.mxu0 0
      %693 = vmatpush1.bf16.msra.mxu0 %v329
      %694 = vmatprep.subr.bf16.mxu0 0
      %695 = vmatpush1.bf16.msra.mxu0 %v330
      %696 = vmatprep.subr.bf16.mxu0 0
      %697 = vmatpush1.bf16.msra.mxu0 %v331
      %698 = vmatprep.subr.bf16.mxu0 0
      %699 = vmatpush1.bf16.msra.mxu0 %v332
      %700 = vmatprep.subr.bf16.mxu0 0
      %701 = vmatpush1.bf16.msra.mxu0 %v356
      %702 = vmatprep.subr.bf16.mxu0 0
      %703 = vmatpush1.bf16.msra.mxu0 0
      %704 = vmatprep.subr.bf16.mxu0 0
      %705 = vmatpush1.bf16.msra.mxu0 0
      %706 = vmatprep.subr.bf16.mxu0 0
      %707 = vmatpush1.bf16.msra.mxu0 0
      %708 = vmatprep.subr.bf16.mxu0 0
      %709 = vmatpush1.bf16.msra.mxu0 0
      %710 = vmatprep.subr.bf16.mxu0 0
      %711 = vmatpush1.bf16.msra.mxu0 0
      %712 = vmatprep.subr.bf16.mxu0 0
      %713 = vmatpush1.bf16.msra.mxu0 0
      %714 = vmatprep.subr.bf16.mxu0 0
      %715 = vmatpush1.bf16.msra.mxu0 0
      %716 = vmatprep.subr.bf16.mxu0 0
      %717 = vmatpush1.bf16.msra.mxu0 0
      %718 = vmatprep.subr.bf16.mxu0 0
      %719 = vmatpush1.bf16.msra.mxu0 0
      %720 = vmatprep.subr.bf16.mxu0 0
      %721 = vmatpush1.bf16.msra.mxu0 0
      %722 = vmatprep.subr.bf16.mxu0 0
      %723 = vmatpush1.bf16.msra.mxu0 0
      %724 = vmatprep.mubr.bf16.mxu0 0
      %725 = vmatmul.mubr.bf16.gmra.mrb[0].mxu0 %v681
      %v726 = vpop.f32.mrb[0].mxu0
      %v727 = vadd.f32 0.0, %v726
      %v728 = vpop.f32.mrb[0].mxu0
      %v729 = vpop.f32.mrb[0].mxu0
      %v730 = vadd.f32 0.0, %v729
      %v731 = vpop.f32.mrb[0].mxu0
      %732 = vmatprep.mubr.bf16.mxu0 0
      %733 = vmatmul.mubr.bf16.gmra.mrb[0].mxu0 %v684
      %v734 = vpop.f32.mrb[0].mxu0
      %v735 = vadd.f32 0.0, %v734
      %v736 = vpop.f32.mrb[0].mxu0
      %v737 = vpop.f32.mrb[0].mxu0
      %v738 = vadd.f32 0.0, %v737
      %v739 = vpop.f32.mrb[0].mxu0
      %740 = vmatprep.mubr.bf16.mxu0 0
      %741 = vmatmul.mubr.bf16.gmra.mrb[0].mxu0 %v687
      %v742 = vpop.f32.mrb[0].mxu0
      %v743 = vadd.f32 0.0, %v742
      %v744 = vpop.f32.mrb[0].mxu0
      %v745 = vpop.f32.mrb[0].mxu0
      %v746 = vadd.f32 0.0, %v745
      %v747 = vpop.f32.mrb[0].mxu0
      %748 = vmatprep.mubr.bf16.mxu0 0
      %749 = vmatmul.mubr.bf16.gmra.mrb[0].mxu0 %v690
      %v750 = vpop.f32.mrb[0].mxu0
      %v751 = vadd.f32 0.0, %v750
      %v752 = vpop.f32.mrb[0].mxu0
      %v753 = vpop.f32.mrb[0].mxu0
      %v754 = vadd.f32 0.0, %v753
      %v755 = vpop.f32.mrb[0].mxu0
      %756 = vdwg.mxu0
      %v757 = vmax.f32 %v643, %v727
      %v758 = vmax.f32 %v644, %v730
      %v759 = vmax.f32 %v645, %v735
      %v760 = vmax.f32 %v646, %v738
      %v761 = vmax.f32 %v647, %v743
      %v762 = vmax.f32 %v648, %v746
      %v763 = vmax.f32 %v649, %v751
      %v764 = vmax.f32 %v650, %v754
      %s765 = scalar_lea.vmem %s251, 128
      %v766 = vld [vmem:[%s765] sm:$0xf]
      %v767 = vld [vmem:[%s765 + $0x4] sm:$0xf]
      %v768 = vld [vmem:[%s765 + $0x8] sm:$0xf]
      %v769 = vld [vmem:[%s765 + $0xc] sm:$0xf]
      %v770 = vld [vmem:[%s765 + $0x10] sm:$0xf]
      %v771 = vld [vmem:[%s765 + $0x14] sm:$0xf]
      %v772 = vld [vmem:[%s765 + $0x18] sm:$0xf]
      %v773 = vld [vmem:[%s765 + $0x1c] sm:$0xf]
      %v782 = vunpack.c.l.b16 %v766
      %v783 = vunpack.c.l.b16 %v767
      %v784 = vunpack.c.l.b16 %v768
      %v785 = vunpack.c.l.b16 %v769
      %v786 = vunpack.c.l.b16 %v770
      %v787 = vunpack.c.l.b16 %v771
      %v788 = vunpack.c.l.b16 %v772
      %v789 = vunpack.c.l.b16 %v773
      %v790 = vpack.c.b16 %v783, %v782
      %v791 = vpack.c.b16 %v785, %v784
      %v792 = vpack.c.b16 %v787, %v786
      %v793 = vpack.c.b16 %v789, %v788
      %v795 = vsel %vm338, %v790, 0
      %v798 = vsel %vm338, %v791, 0
      %v801 = vsel %vm338, %v792, 0
      %v804 = vsel %vm338, %v793, 0
      %806 = vmatprep.subr.bf16.mxu0 0
      %807 = vmatpush1.bf16.msra.mxu0 %v329
      %808 = vmatprep.subr.bf16.mxu0 0
      %809 = vmatpush1.bf16.msra.mxu0 %v330
      %810 = vmatprep.subr.bf16.mxu0 0
      %811 = vmatpush1.bf16.msra.mxu0 %v331
      %812 = vmatprep.subr.bf16.mxu0 0
      %813 = vmatpush1.bf16.msra.mxu0 %v332
      %814 = vmatprep.subr.bf16.mxu0 0
      %815 = vmatpush1.bf16.msra.mxu0 %v356
      %816 = vmatprep.subr.bf16.mxu0 0
      %817 = vmatpush1.bf16.msra.mxu0 0
      %818 = vmatprep.subr.bf16.mxu0 0
      %819 = vmatpush1.bf16.msra.mxu0 0
      %820 = vmatprep.subr.bf16.mxu0 0
      %821 = vmatpush1.bf16.msra.mxu0 0
      %822 = vmatprep.subr.bf16.mxu0 0
      %823 = vmatpush1.bf16.msra.mxu0 0
      %824 = vmatprep.subr.bf16.mxu0 0
      %825 = vmatpush1.bf16.msra.mxu0 0
      %826 = vmatprep.subr.bf16.mxu0 0
      %827 = vmatpush1.bf16.msra.mxu0 0
      %828 = vmatprep.subr.bf16.mxu0 0
      %829 = vmatpush1.bf16.msra.mxu0 0
      %830 = vmatprep.subr.bf16.mxu0 0
      %831 = vmatpush1.bf16.msra.mxu0 0
      %832 = vmatprep.subr.bf16.mxu0 0
      %833 = vmatpush1.bf16.msra.mxu0 0
      %834 = vmatprep.subr.bf16.mxu0 0
      %835 = vmatpush1.bf16.msra.mxu0 0
      %836 = vmatprep.subr.bf16.mxu0 0
      %837 = vmatpush1.bf16.msra.mxu0 0
      %838 = vmatprep.mubr.bf16.mxu0 0
      %839 = vmatmul.mubr.bf16.gmra.mrb[0].mxu0 %v795
      %v840 = vpop.f32.mrb[0].mxu0
      %v841 = vadd.f32 0.0, %v840
      %v842 = vpop.f32.mrb[0].mxu0
      %v843 = vpop.f32.mrb[0].mxu0
      %v844 = vadd.f32 0.0, %v843
      %v845 = vpop.f32.mrb[0].mxu0
      %846 = vmatprep.mubr.bf16.mxu0 0
      %847 = vmatmul.mubr.bf16.gmra.mrb[0].mxu0 %v798
      %v848 = vpop.f32.mrb[0].mxu0
      %v849 = vadd.f32 0.0, %v848
      %v850 = vpop.f32.mrb[0].mxu0
      %v851 = vpop.f32.mrb[0].mxu0
      %v852 = vadd.f32 0.0, %v851
      %v853 = vpop.f32.mrb[0].mxu0
      %854 = vmatprep.mubr.bf16.mxu0 0
      %855 = vmatmul.mubr.bf16.gmra.mrb[0].mxu0 %v801
      %v856 = vpop.f32.mrb[0].mxu0
      %v857 = vadd.f32 0.0, %v856
      %v858 = vpop.f32.mrb[0].mxu0
      %v859 = vpop.f32.mrb[0].mxu0
      %v860 = vadd.f32 0.0, %v859
      %v861 = vpop.f32.mrb[0].mxu0
      %862 = vmatprep.mubr.bf16.mxu0 0
      %863 = vmatmul.mubr.bf16.gmra.mrb[0].mxu0 %v804
      %v864 = vpop.f32.mrb[0].mxu0
      %v865 = vadd.f32 0.0, %v864
      %v866 = vpop.f32.mrb[0].mxu0
      %v867 = vpop.f32.mrb[0].mxu0
      %v868 = vadd.f32 0.0, %v867
      %v869 = vpop.f32.mrb[0].mxu0
      %870 = vdwg.mxu0
      %v871 = vmax.f32 %v757, %v841
      %v872 = vmax.f32 %v758, %v844
      %v873 = vmax.f32 %v759, %v849
      %v874 = vmax.f32 %v760, %v852
      %v875 = vmax.f32 %v761, %v857
      %v876 = vmax.f32 %v762, %v860
      %v877 = vmax.f32 %v763, %v865
      %v878 = vmax.f32 %v764, %v868
      %s879 = scalar_lea.vmem %s251, 160
      %v880 = vld [vmem:[%s879] sm:$0xf]
      %v881 = vld [vmem:[%s879 + $0x4] sm:$0xf]
      %v882 = vld [vmem:[%s879 + $0x8] sm:$0xf]
      %v883 = vld [vmem:[%s879 + $0xc] sm:$0xf]
      %v884 = vld [vmem:[%s879 + $0x10] sm:$0xf]
      %v885 = vld [vmem:[%s879 + $0x14] sm:$0xf]
      %v886 = vld [vmem:[%s879 + $0x18] sm:$0xf]
      %v887 = vld [vmem:[%s879 + $0x1c] sm:$0xf]
      %v896 = vunpack.c.l.b16 %v880
      %v897 = vunpack.c.l.b16 %v881
      %v898 = vunpack.c.l.b16 %v882
      %v899 = vunpack.c.l.b16 %v883
      %v900 = vunpack.c.l.b16 %v884
      %v901 = vunpack.c.l.b16 %v885
      %v902 = vunpack.c.l.b16 %v886
      %v903 = vunpack.c.l.b16 %v887
      %v904 = vpack.c.b16 %v897, %v896
      %v905 = vpack.c.b16 %v899, %v898
      %v906 = vpack.c.b16 %v901, %v900
      %v907 = vpack.c.b16 %v903, %v902
      %v909 = vsel %vm338, %v904, 0
      %v912 = vsel %vm338, %v905, 0
      %v915 = vsel %vm338, %v906, 0
      %v918 = vsel %vm338, %v907, 0
      %920 = vmatprep.subr.bf16.mxu0 0
      %921 = vmatpush1.bf16.msra.mxu0 %v329
      %922 = vmatprep.subr.bf16.mxu0 0
      %923 = vmatpush1.bf16.msra.mxu0 %v330
      %924 = vmatprep.subr.bf16.mxu0 0
      %925 = vmatpush1.bf16.msra.mxu0 %v331
      %926 = vmatprep.subr.bf16.mxu0 0
      %927 = vmatpush1.bf16.msra.mxu0 %v332
      %928 = vmatprep.subr.bf16.mxu0 0
      %929 = vmatpush1.bf16.msra.mxu0 %v356
      %930 = vmatprep.subr.bf16.mxu0 0
      %931 = vmatpush1.bf16.msra.mxu0 0
      %932 = vmatprep.subr.bf16.mxu0 0
      %933 = vmatpush1.bf16.msra.mxu0 0
      %934 = vmatprep.subr.bf16.mxu0 0
      %935 = vmatpush1.bf16.msra.mxu0 0
      %936 = vmatprep.subr.bf16.mxu0 0
      %937 = vmatpush1.bf16.msra.mxu0 0
      %938 = vmatprep.subr.bf16.mxu0 0
      %939 = vmatpush1.bf16.msra.mxu0 0
      %940 = vmatprep.subr.bf16.mxu0 0
      %941 = vmatpush1.bf16.msra.mxu0 0
      %942 = vmatprep.subr.bf16.mxu0 0
      %943 = vmatpush1.bf16.msra.mxu0 0
      %944 = vmatprep.subr.bf16.mxu0 0
      %945 = vmatpush1.bf16.msra.mxu0 0
      %946 = vmatprep.subr.bf16.mxu0 0
      %947 = vmatpush1.bf16.msra.mxu0 0
      %948 = vmatprep.subr.bf16.mxu0 0
      %949 = vmatpush1.bf16.msra.mxu0 0
      %950 = vmatprep.subr.bf16.mxu0 0
      %951 = vmatpush1.bf16.msra.mxu0 0
      %952 = vmatprep.mubr.bf16.mxu0 0
      %953 = vmatmul.mubr.bf16.gmra.mrb[0].mxu0 %v909
      %v954 = vpop.f32.mrb[0].mxu0
      %v955 = vadd.f32 0.0, %v954
      %v956 = vpop.f32.mrb[0].mxu0
      %v957 = vpop.f32.mrb[0].mxu0
      %v958 = vadd.f32 0.0, %v957
      %v959 = vpop.f32.mrb[0].mxu0
      %960 = vmatprep.mubr.bf16.mxu0 0
      %961 = vmatmul.mubr.bf16.gmra.mrb[0].mxu0 %v912
      %v962 = vpop.f32.mrb[0].mxu0
      %v963 = vadd.f32 0.0, %v962
      %v964 = vpop.f32.mrb[0].mxu0
      %v965 = vpop.f32.mrb[0].mxu0
      %v966 = vadd.f32 0.0, %v965
      %v967 = vpop.f32.mrb[0].mxu0
      %968 = vmatprep.mubr.bf16.mxu0 0
      %969 = vmatmul.mubr.bf16.gmra.mrb[0].mxu0 %v915
      %v970 = vpop.f32.mrb[0].mxu0
      %v971 = vadd.f32 0.0, %v970
      %v972 = vpop.f32.mrb[0].mxu0
      %v973 = vpop.f32.mrb[0].mxu0
      %v974 = vadd.f32 0.0, %v973
      %v975 = vpop.f32.mrb[0].mxu0
      %976 = vmatprep.mubr.bf16.mxu0 0
      %977 = vmatmul.mubr.bf16.gmra.mrb[0].mxu0 %v918
      %v978 = vpop.f32.mrb[0].mxu0
      %v979 = vadd.f32 0.0, %v978
      %v980 = vpop.f32.mrb[0].mxu0
      %v981 = vpop.f32.mrb[0].mxu0
      %v982 = vadd.f32 0.0, %v981
      %v983 = vpop.f32.mrb[0].mxu0
      %984 = vdwg.mxu0
      %v985 = vmax.f32 %v871, %v955
      %v986 = vmax.f32 %v872, %v958
      %v987 = vmax.f32 %v873, %v963
      %v988 = vmax.f32 %v874, %v966
      %v989 = vmax.f32 %v875, %v971
      %v990 = vmax.f32 %v876, %v974
      %v991 = vmax.f32 %v877, %v979
      %v992 = vmax.f32 %v878, %v982
      %s993 = scalar_lea.vmem %s251, 192
      %v994 = vld [vmem:[%s993] sm:$0xf]
      %v995 = vld [vmem:[%s993 + $0x4] sm:$0xf]
      %v996 = vld [vmem:[%s993 + $0x8] sm:$0xf]
      %v997 = vld [vmem:[%s993 + $0xc] sm:$0xf]
      %v998 = vld [vmem:[%s993 + $0x10] sm:$0xf]
      %v999 = vld [vmem:[%s993 + $0x14] sm:$0xf]
      %v1000 = vld [vmem:[%s993 + $0x18] sm:$0xf]
      %v1001 = vld [vmem:[%s993 + $0x1c] sm:$0xf]
      %v1010 = vunpack.c.l.b16 %v994
      %v1011 = vunpack.c.l.b16 %v995
      %v1012 = vunpack.c.l.b16 %v996
      %v1013 = vunpack.c.l.b16 %v997
      %v1014 = vunpack.c.l.b16 %v998
      %v1015 = vunpack.c.l.b16 %v999
      %v1016 = vunpack.c.l.b16 %v1000
      %v1017 = vunpack.c.l.b16 %v1001
      %v1018 = vpack.c.b16 %v1011, %v1010
      %v1019 = vpack.c.b16 %v1013, %v1012
      %v1020 = vpack.c.b16 %v1015, %v1014
      %v1021 = vpack.c.b16 %v1017, %v1016
      %v1023 = vsel %vm338, %v1018, 0
      %v1026 = vsel %vm338, %v1019, 0
      %v1029 = vsel %vm338, %v1020, 0
      %v1032 = vsel %vm338, %v1021, 0
      %1034 = vmatprep.subr.bf16.mxu0 0
      %1035 = vmatpush1.bf16.msra.mxu0 %v329
      %1036 = vmatprep.subr.bf16.mxu0 0
      %1037 = vmatpush1.bf16.msra.mxu0 %v330
      %1038 = vmatprep.subr.bf16.mxu0 0
      %1039 = vmatpush1.bf16.msra.mxu0 %v331
      %1040 = vmatprep.subr.bf16.mxu0 0
      %1041 = vmatpush1.bf16.msra.mxu0 %v332
      %1042 = vmatprep.subr.bf16.mxu0 0
      %1043 = vmatpush1.bf16.msra.mxu0 %v356
      %1044 = vmatprep.subr.bf16.mxu0 0
      %1045 = vmatpush1.bf16.msra.mxu0 0
      %1046 = vmatprep.subr.bf16.mxu0 0
      %1047 = vmatpush1.bf16.msra.mxu0 0
      %1048 = vmatprep.subr.bf16.mxu0 0
      %1049 = vmatpush1.bf16.msra.mxu0 0
      %1050 = vmatprep.subr.bf16.mxu0 0
      %1051 = vmatpush1.bf16.msra.mxu0 0
      %1052 = vmatprep.subr.bf16.mxu0 0
      %1053 = vmatpush1.bf16.msra.mxu0 0
      %1054 = vmatprep.subr.bf16.mxu0 0
      %1055 = vmatpush1.bf16.msra.mxu0 0
      %1056 = vmatprep.subr.bf16.mxu0 0
      %1057 = vmatpush1.bf16.msra.mxu0 0
      %1058 = vmatprep.subr.bf16.mxu0 0
      %1059 = vmatpush1.bf16.msra.mxu0 0
      %1060 = vmatprep.subr.bf16.mxu0 0
      %1061 = vmatpush1.bf16.msra.mxu0 0
      %1062 = vmatprep.subr.bf16.mxu0 0
      %1063 = vmatpush1.bf16.msra.mxu0 0
      %1064 = vmatprep.subr.bf16.mxu0 0
      %1065 = vmatpush1.bf16.msra.mxu0 0
      %1066 = vmatprep.mubr.bf16.mxu0 0
      %1067 = vmatmul.mubr.bf16.gmra.mrb[0].mxu0 %v1023
      %v1068 = vpop.f32.mrb[0].mxu0
      %v1069 = vadd.f32 0.0, %v1068
      %v1070 = vpop.f32.mrb[0].mxu0
      %v1071 = vpop.f32.mrb[0].mxu0
      %v1072 = vadd.f32 0.0, %v1071
      %v1073 = vpop.f32.mrb[0].mxu0
      %1074 = vmatprep.mubr.bf16.mxu0 0
      %1075 = vmatmul.mubr.bf16.gmra.mrb[0].mxu0 %v1026
      %v1076 = vpop.f32.mrb[0].mxu0
      %v1077 = vadd.f32 0.0, %v1076
      %v1078 = vpop.f32.mrb[0].mxu0
      %v1079 = vpop.f32.mrb[0].mxu0
      %v1080 = vadd.f32 0.0, %v1079
      %v1081 = vpop.f32.mrb[0].mxu0
      %1082 = vmatprep.mubr.bf16.mxu0 0
      %1083 = vmatmul.mubr.bf16.gmra.mrb[0].mxu0 %v1029
      %v1084 = vpop.f32.mrb[0].mxu0
      %v1085 = vadd.f32 0.0, %v1084
      %v1086 = vpop.f32.mrb[0].mxu0
      %v1087 = vpop.f32.mrb[0].mxu0
      %v1088 = vadd.f32 0.0, %v1087
      %v1089 = vpop.f32.mrb[0].mxu0
      %1090 = vmatprep.mubr.bf16.mxu0 0
      %1091 = vmatmul.mubr.bf16.gmra.mrb[0].mxu0 %v1032
      %v1092 = vpop.f32.mrb[0].mxu0
      %v1093 = vadd.f32 0.0, %v1092
      %v1094 = vpop.f32.mrb[0].mxu0
      %v1095 = vpop.f32.mrb[0].mxu0
      %v1096 = vadd.f32 0.0, %v1095
      %v1097 = vpop.f32.mrb[0].mxu0
      %1098 = vdwg.mxu0
      %v1099 = vmax.f32 %v985, %v1069
      %v1100 = vmax.f32 %v986, %v1072
      %v1101 = vmax.f32 %v987, %v1077
      %v1102 = vmax.f32 %v988, %v1080
      %v1103 = vmax.f32 %v989, %v1085
      %v1104 = vmax.f32 %v990, %v1088
      %v1105 = vmax.f32 %v991, %v1093
      %v1106 = vmax.f32 %v992, %v1096
      %s1107 = scalar_lea.vmem %s251, 224
      %v1108 = vld [vmem:[%s1107] sm:$0xf]
      %v1109 = vld [vmem:[%s1107 + $0x4] sm:$0xf]
      %v1110 = vld [vmem:[%s1107 + $0x8] sm:$0xf]
      %v1111 = vld [vmem:[%s1107 + $0xc] sm:$0xf]
      %v1112 = vld [vmem:[%s1107 + $0x10] sm:$0xf]
      %v1113 = vld [vmem:[%s1107 + $0x14] sm:$0xf]
      %v1114 = vld [vmem:[%s1107 + $0x18] sm:$0xf]
      %v1115 = vld [vmem:[%s1107 + $0x1c] sm:$0xf]
      %v1124 = vunpack.c.l.b16 %v1108
      %v1125 = vunpack.c.l.b16 %v1109
      %v1126 = vunpack.c.l.b16 %v1110
      %v1127 = vunpack.c.l.b16 %v1111
      %v1128 = vunpack.c.l.b16 %v1112
      %v1129 = vunpack.c.l.b16 %v1113
      %v1130 = vunpack.c.l.b16 %v1114
      %v1131 = vunpack.c.l.b16 %v1115
      %v1132 = vpack.c.b16 %v1125, %v1124
      %v1133 = vpack.c.b16 %v1127, %v1126
      %v1134 = vpack.c.b16 %v1129, %v1128
      %v1135 = vpack.c.b16 %v1131, %v1130
      %v1137 = vsel %vm338, %v1132, 0
      %v1140 = vsel %vm338, %v1133, 0
      %v1143 = vsel %vm338, %v1134, 0
      %v1146 = vsel %vm338, %v1135, 0
      %1148 = vmatprep.subr.bf16.mxu0 0
      %1149 = vmatpush1.bf16.msra.mxu0 %v329
      %1150 = vmatprep.subr.bf16.mxu0 0
      %1151 = vmatpush1.bf16.msra.mxu0 %v330
      %1152 = vmatprep.subr.bf16.mxu0 0
      %1153 = vmatpush1.bf16.msra.mxu0 %v331
      %1154 = vmatprep.subr.bf16.mxu0 0
      %1155 = vmatpush1.bf16.msra.mxu0 %v332
      %1156 = vmatprep.subr.bf16.mxu0 0
      %1157 = vmatpush1.bf16.msra.mxu0 %v356
      %1158 = vmatprep.subr.bf16.mxu0 0
      %1159 = vmatpush1.bf16.msra.mxu0 0
      %1160 = vmatprep.subr.bf16.mxu0 0
      %1161 = vmatpush1.bf16.msra.mxu0 0
      %1162 = vmatprep.subr.bf16.mxu0 0
      %1163 = vmatpush1.bf16.msra.mxu0 0
      %1164 = vmatprep.subr.bf16.mxu0 0
      %1165 = vmatpush1.bf16.msra.mxu0 0
      %1166 = vmatprep.subr.bf16.mxu0 0
      %1167 = vmatpush1.bf16.msra.mxu0 0
      %1168 = vmatprep.subr.bf16.mxu0 0
      %1169 = vmatpush1.bf16.msra.mxu0 0
      %1170 = vmatprep.subr.bf16.mxu0 0
      %1171 = vmatpush1.bf16.msra.mxu0 0
      %1172 = vmatprep.subr.bf16.mxu0 0
      %1173 = vmatpush1.bf16.msra.mxu0 0
      %1174 = vmatprep.subr.bf16.mxu0 0
      %1175 = vmatpush1.bf16.msra.mxu0 0
      %1176 = vmatprep.subr.bf16.mxu0 0
      %1177 = vmatpush1.bf16.msra.mxu0 0
      %1178 = vmatprep.subr.bf16.mxu0 0
      %1179 = vmatpush1.bf16.msra.mxu0 0
      %1180 = vmatprep.mubr.bf16.mxu0 0
      %1181 = vmatmul.mubr.bf16.gmra.mrb[0].mxu0 %v1137
      %v1182 = vpop.f32.mrb[0].mxu0
      %v1183 = vadd.f32 0.0, %v1182
      %v1184 = vpop.f32.mrb[0].mxu0
      %v1185 = vpop.f32.mrb[0].mxu0
      %v1186 = vadd.f32 0.0, %v1185
      %v1187 = vpop.f32.mrb[0].mxu0
      %1188 = vmatprep.mubr.bf16.mxu0 0
      %1189 = vmatmul.mubr.bf16.gmra.mrb[0].mxu0 %v1140
      %v1190 = vpop.f32.mrb[0].mxu0
      %v1191 = vadd.f32 0.0, %v1190
      %v1192 = vpop.f32.mrb[0].mxu0
      %v1193 = vpop.f32.mrb[0].mxu0
      %v1194 = vadd.f32 0.0, %v1193
      %v1195 = vpop.f32.mrb[0].mxu0
      %1196 = vmatprep.mubr.bf16.mxu0 0
      %1197 = vmatmul.mubr.bf16.gmra.mrb[0].mxu0 %v1143
      %v1198 = vpop.f32.mrb[0].mxu0
      %v1199 = vadd.f32 0.0, %v1198
      %v1200 = vpop.f32.mrb[0].mxu0
      %v1201 = vpop.f32.mrb[0].mxu0
      %v1202 = vadd.f32 0.0, %v1201
      %v1203 = vpop.f32.mrb[0].mxu0
      %1204 = vmatprep.mubr.bf16.mxu0 0
      %1205 = vmatmul.mubr.bf16.gmra.mrb[0].mxu0 %v1146
      %v1206 = vpop.f32.mrb[0].mxu0
      %v1207 = vadd.f32 0.0, %v1206
      %v1208 = vpop.f32.mrb[0].mxu0
      %v1209 = vpop.f32.mrb[0].mxu0
      %v1210 = vadd.f32 0.0, %v1209
      %v1211 = vpop.f32.mrb[0].mxu0
      %1212 = vdwg.mxu0
      %v1213 = vmax.f32 %v1099, %v1183
      %v1214 = vmax.f32 %v1100, %v1186
      %v1215 = vmax.f32 %v1101, %v1191
      %v1216 = vmax.f32 %v1102, %v1194
      %v1217 = vmax.f32 %v1103, %v1199
      %v1218 = vmax.f32 %v1104, %v1202
      %v1219 = vmax.f32 %v1105, %v1207
      %v1220 = vmax.f32 %v1106, %v1210
      %v1221 = vld [vmem:[%s2] sm:$0x1]
      %v1223 = vlaneseq
      %v1224 = vshrl.u32 %v1223, 7
      %v1225 = vsub.s32 0, %v1224
      %v1226 = vrot.slane %v1221, %v1225
      %v1228 = vadd.f32 %v1213, %v1226
      %v1229 = vadd.f32 %v1214, %v1226
      %v1230 = vadd.f32 %v1215, %v1226
      %v1231 = vadd.f32 %v1216, %v1226
      %v1232 = vadd.f32 %v1217, %v1226
      %v1233 = vadd.f32 %v1218, %v1226
      %v1234 = vadd.f32 %v1219, %v1226
      %v1235 = vadd.f32 %v1220, %v1226
      %vm1236 = vcmp.gt.f32.partialorder %v1228, 0.0
      %vm1237 = vcmp.gt.f32.partialorder %v1229, 0.0
      %vm1238 = vcmp.gt.f32.partialorder %v1230, 0.0
      %vm1239 = vcmp.gt.f32.partialorder %v1231, 0.0
      %vm1240 = vcmp.gt.f32.partialorder %v1232, 0.0
      %vm1241 = vcmp.gt.f32.partialorder %v1233, 0.0
      %vm1242 = vcmp.gt.f32.partialorder %v1234, 0.0
      %vm1243 = vcmp.gt.f32.partialorder %v1235, 0.0
      %v1244 = vmul.f32 %v1228, 0.1
      %v1245 = vmul.f32 %v1229, 0.1
      %v1246 = vmul.f32 %v1230, 0.1
      %v1247 = vmul.f32 %v1231, 0.1
      %v1248 = vmul.f32 %v1232, 0.1
      %v1249 = vmul.f32 %v1233, 0.1
      %v1250 = vmul.f32 %v1234, 0.1
      %v1251 = vmul.f32 %v1235, 0.1
      %v1252 = vsel %vm1236, %v1228, %v1244
      %v1253 = vsel %vm1237, %v1229, %v1245
      %v1254 = vsel %vm1238, %v1230, %v1246
      %v1255 = vsel %vm1239, %v1231, %v1247
      %v1256 = vsel %vm1240, %v1232, %v1248
      %v1257 = vsel %vm1241, %v1233, %v1249
      %v1258 = vsel %vm1242, %v1234, %v1250
      %v1259 = vsel %vm1243, %v1235, %v1251
      %v1260 = vxor.u32 %v1252, 2147483648
      %v1261 = vxor.u32 %v1253, 2147483648
      %v1262 = vxor.u32 %v1254, 2147483648
      %v1263 = vxor.u32 %v1255, 2147483648
      %v1264 = vxor.u32 %v1256, 2147483648
      %v1265 = vxor.u32 %v1257, 2147483648
      %v1266 = vxor.u32 %v1258, 2147483648
      %v1267 = vxor.u32 %v1259, 2147483648
      %v1268 = vmul.f32 %v1260, 1.442695
      %v1269 = vpow.pop %v1268
      %v1270 = vmul.f32 %v1261, 1.442695
      %v1271 = vpow.pop %v1270
      %v1272 = vmul.f32 %v1262, 1.442695
      %v1273 = vpow.pop %v1272
      %v1274 = vmul.f32 %v1263, 1.442695
      %v1275 = vpow.pop %v1274
      %v1276 = vmul.f32 %v1264, 1.442695
      %v1277 = vpow.pop %v1276
      %v1278 = vmul.f32 %v1265, 1.442695
      %v1279 = vpow.pop %v1278
      %v1280 = vmul.f32 %v1266, 1.442695
      %v1281 = vpow.pop %v1280
      %v1282 = vmul.f32 %v1267, 1.442695
      %v1283 = vpow.pop %v1282
      %v1284 = vadd.f32 %v1269, 1.0
      %v1285 = vadd.f32 %v1271, 1.0
      %v1286 = vadd.f32 %v1273, 1.0
      %v1287 = vadd.f32 %v1275, 1.0
      %v1288 = vadd.f32 %v1277, 1.0
      %v1289 = vadd.f32 %v1279, 1.0
      %v1290 = vadd.f32 %v1281, 1.0
      %v1291 = vadd.f32 %v1283, 1.0
      %v1292 = vrcp.pop %v1284
      %v1293 = vmul.f32 1.0, %v1292
      %v1294 = vrcp.pop %v1285
      %v1295 = vmul.f32 1.0, %v1294
      %v1296 = vrcp.pop %v1286
      %v1297 = vmul.f32 1.0, %v1296
      %v1298 = vrcp.pop %v1287
      %v1299 = vmul.f32 1.0, %v1298
      %v1300 = vrcp.pop %v1288
      %v1301 = vmul.f32 1.0, %v1300
      %v1302 = vrcp.pop %v1289
      %v1303 = vmul.f32 1.0, %v1302
      %v1304 = vrcp.pop %v1290
      %v1305 = vmul.f32 1.0, %v1304
      %v1306 = vrcp.pop %v1291
      %v1307 = vmul.f32 1.0, %v1306
      %v1308 = vld [vmem:[%s261] sm:$0xff]
      %v1309 = vld [vmem:[%s261 + $0x8] sm:$0xff]
      %v1310 = vld [vmem:[%s261 + $0x10] sm:$0xff]
      %v1311 = vld [vmem:[%s261 + $0x18] sm:$0xff]
      %v1312 = vld [vmem:[%s261 + $0x20] sm:$0xff]
      %v1313 = vld [vmem:[%s261 + $0x28] sm:$0xff]
      %v1314 = vld [vmem:[%s261 + $0x30] sm:$0xff]
      %v1315 = vld [vmem:[%s261 + $0x38] sm:$0xff]
      %1324 = vrot.lane.b32.xlu0 %v1308, 32
      %v1325 = vpop.permute.xlu0 %1324
      %1326 = vrot.lane.b32.xlu0 %v1309, 32
      %v1327 = vpop.permute.xlu0 %1326
      %1328 = vrot.lane.b32.xlu0 %v1310, 32
      %v1329 = vpop.permute.xlu0 %1328
      %1330 = vrot.lane.b32.xlu0 %v1311, 32
      %v1331 = vpop.permute.xlu0 %1330
      %1332 = vrot.lane.b32.xlu0 %v1312, 32
      %v1333 = vpop.permute.xlu0 %1332
      %1334 = vrot.lane.b32.xlu0 %v1313, 32
      %v1335 = vpop.permute.xlu0 %1334
      %1336 = vrot.lane.b32.xlu0 %v1314, 32
      %v1337 = vpop.permute.xlu0 %1336
      %1338 = vrot.lane.b32.xlu0 %v1315, 32
      %v1339 = vpop.permute.xlu0 %1338
      %vm1348 = vcmask 261120
      %v1349 = vsel %vm1348, 1.0, %v1325
      %v1350 = vsel %vm1348, 1.0, %v1327
      %v1351 = vsel %vm1348, 1.0, %v1329
      %v1352 = vsel %vm1348, 1.0, %v1331
      %v1353 = vsel %vm1348, 1.0, %v1333
      %v1354 = vsel %vm1348, 1.0, %v1335
      %v1355 = vsel %vm1348, 1.0, %v1337
      %v1356 = vsel %vm1348, 1.0, %v1339
      %v1357 = vmul.f32 %v1293, %v1349
      %v1358 = vmul.f32 %v1295, %v1350
      %v1359 = vmul.f32 %v1297, %v1351
      %v1360 = vmul.f32 %v1299, %v1352
      %v1361 = vmul.f32 %v1301, %v1353
      %v1362 = vmul.f32 %v1303, %v1354
      %v1363 = vmul.f32 %v1305, %v1355
      %v1364 = vmul.f32 %v1307, %v1356
      %vm1365 = vcmask 523264
      %1366 = vst.msk [vmem:[%s271] sm:$0xff] %vm1365, %v1357
      %1367 = vst.msk [vmem:[%s271 + $0x8] sm:$0xff] %vm1365, %v1358
      %1368 = vst.msk [vmem:[%s271 + $0x10] sm:$0xff] %vm1365, %v1359
      %1369 = vst.msk [vmem:[%s271 + $0x18] sm:$0xff] %vm1365, %v1360
      %1370 = vst.msk [vmem:[%s271 + $0x20] sm:$0xff] %vm1365, %v1361
      %1371 = vst.msk [vmem:[%s271 + $0x28] sm:$0xff] %vm1365, %v1362
      %1372 = vst.msk [vmem:[%s271 + $0x30] sm:$0xff] %vm1365, %v1363
      %1373 = vst.msk [vmem:[%s271 + $0x38] sm:$0xff] %vm1365, %v1364
      %s1374 = smul.u32 8, %s20
      %p1375 = scmp.lt.s32.totalorder %s19, 1
      %s1376 = scalar_select %p1375, %s19, 1
      %p1377 = scmp.lt.s32.totalorder %s1374, 7
      %s1378 = scalar_select %p1377, %s1374, 7
      %s1379 = smul.addr %s1376, 8
      %s1380 = sadd.s32 %s1378, %s1379
      %s1381 = smul.addr %s1380, 8
      %s1382 = scalar_lea.vmem %s4, %s1381
      // Predicated region
      $region37: #{gru_forward.2} parent=35 // pred_check
        %p1383 = pneg %p145
      $region38: #{gru_forward.2} parent=35 // pred_check_branch
        %1385 = sbr.rel (%p1383) target = $region40
      $region39: #{gru_forward.2} parent=35 // pred_region
        %s1386 = smul.u32 8, %s20
      $region40: #{gru_forward.2} parent=35 // pred_fallthru
        _
    $region36: #{gru_forward.2} parent=5 // pred_fallthru
      _
    %p1387 = scmp.le.s32.totalorder 2, %s10
    // Predicated region
    $region41: #{gru_forward.2} parent=5 // pred_check
      %p1388 = pneg %p1387
    $region42: #{gru_forward.2} parent=5 // pred_check_branch
      %1390 = sbr.rel (%p1388) target = $region44
    $region43: #{gru_forward.2} parent=5 // pred_region
      %s1391 = ssub.s32 %s10, 2
      // Predicated region
      $region45: #{gru_forward.2} parent=43 // pred_check
        %p1392 = pneg %p151
      $region46: #{gru_forward.2} parent=43 // pred_check_branch
        %1394 = sbr.rel (%p1392) target = $region48
      $region47: #{gru_forward.2} parent=43 // pred_region
        %s1395 = smul.u32 8, %s22
        %p1396 = scmp.lt.s32.totalorder %s21, 1
        %s1397 = scalar_select %p1396, %s21, 1
        %p1398 = scmp.lt.s32.totalorder %s1395, 7
        %s1399 = scalar_select %p1398, %s1395, 7
        %s1400 = smul.addr %s1397, 8
        %s1401 = sadd.s32 %s1399, %s1400
        %s1402 = smul.addr %s1401, 8
        %s1403 = scalar_lea.vmem %s4, %s1402
      $region48: #{gru_forward.2} parent=43 // pred_fallthru
        _
    $region44: #{gru_forward.2} parent=5 // pred_fallthru
      _
  $region6: #{gru_forward.2} parent=0 // loop_footer
    %s14 = sadd.s32 1, %s10
  $region7: #{gru_forward.2} parent=0 // loop_footer_branch
    %9 = sbr.rel target = $region3
  $region8: #{gru_forward.2} parent=0 // loop_exit
    _

</llo_original>
